<compile_context>
chip_gen: v7x
topology: tpu7x:2x2x1
jax: 0.10.0
libtpu: 0.0.40
codegen_flags: <defaults>
</compile_context>

<pallas_src>
import jax
import jax.numpy as jnp
from jax.experimental import pallas as pl
from jax.experimental.pallas import tpu as pltpu


GATE_STRIDE = 128  # per-gate lane stride; each gate padded to a full vreg of lanes


def gru_rnn_kernel(flag_ref, x0_ref, wx_ref, wh_ref, bx_ref, bh_ref,
                   wl_ref, bl_ref, out_ref):
    """Whole sequential recurrence runs inside the kernel (hot path).

    flag_ref : SMEM (1,) int32        -- 1 if t[0] > 0 else 0
    x0_ref   : VMEM (1, I)      f32   -- x[0], the (only) input fed each step
    wx_ref   : VMEM (I, 3*HP)   f32   -- fused+padded input weights  [r | z | n]
    wh_ref   : VMEM (HP, 3*HP)  bf16  -- fused+padded hidden weights [r | z | n]
    bx_ref   : VMEM (1, 3*HP)   f32   -- fused+padded input biases
    bh_ref   : VMEM (1, 3*HP)   f32   -- fused+padded hidden biases
    wl_ref   : VMEM (HP, O)     bf16  -- row-padded readout weight
    bl_ref   : VMEM (1, O)      f32   -- readout bias
    out_ref  : VMEM (N, O)      f32   -- output sequence

    HP = GATE_STRIDE (hidden padded to a 128-lane vreg; padded lanes of h are
    provably zero for all steps because the padded weight rows/cols and biases
    are zero, so they never contaminate the real lanes or the readout).
    """
    hp = wh_ref.shape[0]               # padded hidden (128)
    n_steps = out_ref.shape[0]

    flag = flag_ref[0]

    x0 = x0_ref[...]                   # (1, I)
    wh = wh_ref[...]                   # (HP, 3HP) bf16, hoisted: loaded once
    bh = bh_ref[...]                   # (1, 3HP)

    # Input-side gate pre-activations are constant across steps (x[0] reused):
    # one f32 matmul, off the per-step critical path.
    gx = jnp.dot(x0, wx_ref[...], preferred_element_type=jnp.float32) + bx_ref[...]

    # Fold the hidden r/z biases into the hoisted term; the n-gate hidden bias
    # sits inside the reset multiplication, so it stays per-step.
    # All slices below land on 128-lane vreg boundaries -> pure vreg selection.
    gx_rz = gx[:, :2 * hp] + bh[:, :2 * hp]      # (1, 2HP)
    gx_n = gx[:, 2 * hp:]                        # (1, HP)
    bh_n = bh[:, 2 * hp:]                        # (1, HP)

    def cell(h):
        # Single-pass bf16 MXU matmul on the serial critical path.
        gh = jnp.dot(h.astype(jnp.bfloat16), wh,
                     preferred_element_type=jnp.float32)        # (1, 3HP)
        rz = jax.nn.sigmoid(gx_rz + gh[:, :2 * hp])             # one EUP push
        r = rz[:, :hp]                                          # vreg 0
        z = rz[:, hp:]                                          # vreg 1
        n = jnp.tanh(gx_n + r * (gh[:, 2 * hp:] + bh_n))
        return n + z * (h - n)                                  # == (1-z)*n + z*h

    # ---- peeled step 0: executed only when t[0] > 0 (h stays 0 otherwise) ----
    h = cell(jnp.zeros((1, hp), jnp.float32)) * flag.astype(jnp.float32)
    rows = [jnp.maximum(h, 0.0)]

    # ---- steps 1..N-1, unconditional; static unrolled loop, rows kept in vregs ----
    for _ in range(1, n_steps):
        h = cell(h)
        rows.append(jnp.maximum(h, 0.0))

    # ---- deferred readout: one batched bf16 matmul + one store ----
    hs = jnp.concatenate(rows, axis=0)                          # (N, HP), in vregs
    out = jnp.dot(hs.astype(jnp.bfloat16), wl_ref[...],
                  preferred_element_type=jnp.float32) + bl_ref[...]
    out_ref[...] = out

    # When step 0 is skipped, output[0] must be exactly zero (otherwise the
    # batched readout of relu(0) would leave the bias there).
    @pl.when(flag == 0)
    def _():
        out_ref[0:1, :] = jnp.zeros((1, out_ref.shape[1]), jnp.float32)


def prepare_params(params, gate_stride=GATE_STRIDE):
    """One-time parameter fusion / lane-padding / bf16 cast (NOT per-call)."""
    wx, wh, bx, bh, wl, bl = params
    hidden = wh.shape[1]
    assert hidden <= gate_stride, "hidden_size must fit one padded gate block"
    pad_c = gate_stride - hidden

    def pad_cols(a):   # (rows, H) -> (rows, gate_stride)
        return jnp.pad(a, ((0, 0), (0, pad_c)))

    def pad_rc(a):     # (H, H) -> (gate_stride, gate_stride)
        return jnp.pad(a, ((0, pad_c), (0, pad_c)))

    wxf = jnp.concatenate([pad_cols(wx[g]) for g in range(3)], axis=1)  # (I, 3HP) f32
    whf = jnp.concatenate([pad_rc(wh[g]) for g in range(3)],
                          axis=1).astype(jnp.bfloat16)                  # (HP, 3HP) bf16
    bxf = jnp.concatenate([pad_cols(bx[g]) for g in range(3)], axis=1)  # (1, 3HP) f32
    bhf = jnp.concatenate([pad_cols(bh[g]) for g in range(3)], axis=1)  # (1, 3HP) f32
    wlp = jnp.pad(wl, ((0, pad_c), (0, 0))).astype(jnp.bfloat16)        # (HP, O) bf16
    blf = bl.astype(jnp.float32)                                        # (1, O)  f32
    return wxf, whf, bxf, bhf, wlp, blf


@jax.jit
def gru_rnn_forward(t, x, fused_params):
    """Steady-state call path: only flag/x0 extraction + the pallas_call."""
    wxf, whf, bxf, bhf, wlp, blf = fused_params
    t = t.reshape(-1).astype(jnp.float32)
    n_steps = t.shape[0]
    output_size = blf.shape[1]

    x0 = x[0].reshape(1, -1).astype(jnp.float32)              # (1, I)
    flag = (t[0] > 0).astype(jnp.int32).reshape(1)            # (1,)

    vmem = pl.BlockSpec(memory_space=pltpu.MemorySpace.VMEM)
    smem = pl.BlockSpec(memory_space=pltpu.MemorySpace.SMEM)

    return pl.pallas_call(
        gru_rnn_kernel,
        out_shape=jax.ShapeDtypeStruct((n_steps, output_size), jnp.float32),
        in_specs=[smem, vmem, vmem, vmem, vmem, vmem, vmem, vmem],
        out_specs=vmem,
    )(flag, x0, wxf, whf, bxf, bhf, wlp, blf)


def init_params(key, input_size, hidden_size, output_size):
    """Deterministic init mirroring PyTorch's U(-1/sqrt(H), 1/sqrt(H))."""
    ks = jax.random.split(key, 6)
    s = 1.0 / jnp.sqrt(hidden_size)
    wx = jax.random.uniform(ks[0], (3, input_size, hidden_size), jnp.float32, -s, s)
    wh = jax.random.uniform(ks[1], (3, hidden_size, hidden_size), jnp.float32, -s, s)
    bx = jax.random.uniform(ks[2], (3, 1, hidden_size), jnp.float32, -s, s)
    bh = jax.random.uniform(ks[3], (3, 1, hidden_size), jnp.float32, -s, s)
    wl = jax.random.uniform(ks[4], (hidden_size, output_size), jnp.float32, -s, s)
    bl = jax.random.uniform(ks[5], (1, output_size), jnp.float32, -s, s)
    return wx, wh, bx, bh, wl, bl


def reference_forward(t, x, params, output_size):
    """Pure-JAX f32 reference of the same math (unfused, unpadded)."""
    wx, wh, bx, bh, wl, bl = params
    t = t.reshape(-1).astype(jnp.float32)
    n_steps = t.shape[0]
    x0 = x[0].reshape(1, -1).astype(jnp.float32)
    h = jnp.zeros((1, wh.shape[1]), jnp.float32)
    out = jnp.zeros((n_steps, output_size), jnp.float32)

    def cell(h):
        r = jax.nn.sigmoid(x0 @ wx[0] + bx[0] + h @ wh[0] + bh[0])
        z = jax.nn.sigmoid(x0 @ wx[1] + bx[1] + h @ wh[1] + bh[1])
        n = jnp.tanh(x0 @ wx[2] + bx[2] + r * (h @ wh[2] + bh[2]))
        return (1.0 - z) * n + z * h

    start = 0 if float(t[0]) > 0 else 1
    for i in range(start, n_steps):
        h = cell(h)
        out = out.at[i].set((jnp.maximum(h, 0.0) @ wl + bl).reshape(-1))
    return out


if __name__ == "__main__":
    input_size, hidden_size, output_size = 16, 32, 8
    n_steps = 8

    key = jax.random.PRNGKey(0)
    k_p, k_x = jax.random.split(key)
    params = init_params(k_p, input_size, hidden_size, output_size)
    fused_params = prepare_params(params)          # one-time fusion/pad/bf16 cast
    x = jax.random.normal(k_x, (n_steps, input_size), jnp.float32)

    # bf16 MXU issue -> loosened tolerance vs the f32 reference.
    RTOL, ATOL = 2e-2, 2e-2

    # Case 1: t[0] > 0  (step 0 executed)
    t1 = jnp.arange(1, n_steps + 1, dtype=jnp.float32)
    out1 = jax.block_until_ready(gru_rnn_forward(t1, x, fused_params))
    ref1 = reference_forward(t1, x, params, output_size)
    assert out1.shape == (n_steps, output_size)
    assert jnp.allclose(out1, ref1, rtol=RTOL, atol=ATOL), "mismatch (t[0] > 0)"

    # Case 2: t[0] == 0 (step 0 skipped; output[0] must be exactly zero)
    t2 = jnp.arange(0, n_steps, dtype=jnp.float32)
    out2 = jax.block_until_ready(gru_rnn_forward(t2, x, fused_params))
    ref2 = reference_forward(t2, x, params, output_size)
    assert jnp.allclose(out2, ref2, rtol=RTOL, atol=ATOL), "mismatch (t[0] == 0)"
    assert jnp.all(out2[0] == 0.0), "output[0] must be exactly zero when t[0] == 0"

    print("KERNEL_OK")
</pallas_src>

<mosaic_0001>
module attributes {stable_mosaic.version = 11 : i64} {
  func.func @gru_rnn_kernel(%arg0: memref<1xi32, #tpu.memory_space<smem>>, %arg1: memref<1x16xf32, #tpu.memory_space<vmem>>, %arg2: memref<16x384xf32, #tpu.memory_space<vmem>>, %arg3: memref<128x384xbf16, #tpu.memory_space<vmem>>, %arg4: memref<1x384xf32, #tpu.memory_space<vmem>>, %arg5: memref<1x384xf32, #tpu.memory_space<vmem>>, %arg6: memref<128x8xbf16, #tpu.memory_space<vmem>>, %arg7: memref<1x8xf32, #tpu.memory_space<vmem>>, %arg8: memref<8x8xf32, #tpu.memory_space<vmem>>) attributes {dimension_semantics = [], scalar_prefetch = 0 : i64, scratch_operands = 0 : i64, tpu.core_type = #tpu.core_type<tc>} {
    %c0 = arith.constant 0 : index
    %0 = memref.load %arg0[%c0] : memref<1xi32, #tpu.memory_space<smem>>
    %c0_0 = arith.constant 0 : index
    %c0_1 = arith.constant 0 : index
    %1 = vector.load %arg1[%c0_0, %c0_1] : memref<1x16xf32, #tpu.memory_space<vmem>>, vector<1x16xf32>
    %c0_2 = arith.constant 0 : index
    %c0_3 = arith.constant 0 : index
    %2 = vector.load %arg3[%c0_2, %c0_3] : memref<128x384xbf16, #tpu.memory_space<vmem>>, vector<128x384xbf16>
    %c0_4 = arith.constant 0 : index
    %c0_5 = arith.constant 0 : index
    %3 = vector.load %arg5[%c0_4, %c0_5] : memref<1x384xf32, #tpu.memory_space<vmem>>, vector<1x384xf32>
    %c0_6 = arith.constant 0 : index
    %c0_7 = arith.constant 0 : index
    %4 = vector.load %arg2[%c0_6, %c0_7] : memref<16x384xf32, #tpu.memory_space<vmem>>, vector<16x384xf32>
    %cst = arith.constant dense<0.000000e+00> : vector<1x384xf32>
    %5 = tpu.matmul %1, %4, %cst {dimension_numbers = #tpu.dot_dimension_numbers<[1], [0], [0], [1], [0, 0, 1, 1], [], []>} : vector<1x16xf32>, vector<16x384xf32>, vector<1x384xf32> -> vector<1x384xf32>
    %c0_8 = arith.constant 0 : index
    %c0_9 = arith.constant 0 : index
    %6 = vector.load %arg4[%c0_8, %c0_9] : memref<1x384xf32, #tpu.memory_space<vmem>>, vector<1x384xf32>
    %7 = arith.addf %5, %6 : vector<1x384xf32>
    %8 = vector.extract_strided_slice %7 {offsets = [0, 0], sizes = [1, 256], strides = [1, 1]} : vector<1x384xf32> to vector<1x256xf32>
    %9 = vector.extract_strided_slice %3 {offsets = [0, 0], sizes = [1, 256], strides = [1, 1]} : vector<1x384xf32> to vector<1x256xf32>
    %10 = arith.addf %8, %9 : vector<1x256xf32>
    %11 = vector.extract_strided_slice %7 {offsets = [0, 256], sizes = [1, 128], strides = [1, 1]} : vector<1x384xf32> to vector<1x128xf32>
    %12 = vector.extract_strided_slice %3 {offsets = [0, 256], sizes = [1, 128], strides = [1, 1]} : vector<1x384xf32> to vector<1x128xf32>
    %cst_10 = arith.constant 0.000000e+00 : f32
    %13 = vector.broadcast %cst_10 : f32 to vector<1x128xf32>
    %14 = arith.truncf %13 : vector<1x128xf32> to vector<1x128xbf16>
    %cst_11 = arith.constant dense<0.000000e+00> : vector<1x384xf32>
    %15 = tpu.matmul %14, %2, %cst_11 {dimension_numbers = #tpu.dot_dimension_numbers<[1], [0], [0], [1], [0, 0, 1, 1], [], []>} : vector<1x128xbf16>, vector<128x384xbf16>, vector<1x384xf32> -> vector<1x384xf32>
    %16 = vector.extract_strided_slice %15 {offsets = [0, 0], sizes = [1, 256], strides = [1, 1]} : vector<1x384xf32> to vector<1x256xf32>
    %17 = arith.addf %10, %16 : vector<1x256xf32>
    %18 = arith.negf %17 : vector<1x256xf32>
    %19 = math.exp %18 : vector<1x256xf32>
    %cst_12 = arith.constant 1.000000e+00 : f32
    %20 = vector.broadcast %cst_12 : f32 to vector<1x256xf32>
    %21 = arith.addf %20, %19 : vector<1x256xf32>
    %22 = arith.divf %20, %21 : vector<1x256xf32>
    %23 = vector.extract_strided_slice %22 {offsets = [0, 0], sizes = [1, 128], strides = [1, 1]} : vector<1x256xf32> to vector<1x128xf32>
    %24 = vector.extract_strided_slice %22 {offsets = [0, 128], sizes = [1, 128], strides = [1, 1]} : vector<1x256xf32> to vector<1x128xf32>
    %25 = vector.extract_strided_slice %15 {offsets = [0, 256], sizes = [1, 128], strides = [1, 1]} : vector<1x384xf32> to vector<1x128xf32>
    %26 = arith.addf %25, %12 : vector<1x128xf32>
    %27 = arith.mulf %23, %26 : vector<1x128xf32>
    %28 = arith.addf %11, %27 : vector<1x128xf32>
    %29 = math.tanh %28 : vector<1x128xf32>
    %30 = arith.subf %13, %29 : vector<1x128xf32>
    %31 = arith.mulf %24, %30 : vector<1x128xf32>
    %32 = arith.addf %29, %31 : vector<1x128xf32>
    %33 = arith.sitofp %0 : i32 to f32
    %34 = vector.broadcast %33 : f32 to vector<1x128xf32>
    %35 = arith.mulf %32, %34 : vector<1x128xf32>
    %cst_13 = arith.constant 0.000000e+00 : f32
    %36 = vector.broadcast %cst_13 : f32 to vector<1x128xf32>
    %37 = arith.maximumf %35, %36 : vector<1x128xf32>
    %38 = arith.truncf %35 : vector<1x128xf32> to vector<1x128xbf16>
    %cst_14 = arith.constant dense<0.000000e+00> : vector<1x384xf32>
    %39 = tpu.matmul %38, %2, %cst_14 {dimension_numbers = #tpu.dot_dimension_numbers<[1], [0], [0], [1], [0, 0, 1, 1], [], []>} : vector<1x128xbf16>, vector<128x384xbf16>, vector<1x384xf32> -> vector<1x384xf32>
    %40 = vector.extract_strided_slice %39 {offsets = [0, 0], sizes = [1, 256], strides = [1, 1]} : vector<1x384xf32> to vector<1x256xf32>
    %41 = arith.addf %10, %40 : vector<1x256xf32>
    %42 = arith.negf %41 : vector<1x256xf32>
    %43 = math.exp %42 : vector<1x256xf32>
    %cst_15 = arith.constant 1.000000e+00 : f32
    %44 = vector.broadcast %cst_15 : f32 to vector<1x256xf32>
    %45 = arith.addf %44, %43 : vector<1x256xf32>
    %46 = arith.divf %44, %45 : vector<1x256xf32>
    %47 = vector.extract_strided_slice %46 {offsets = [0, 0], sizes = [1, 128], strides = [1, 1]} : vector<1x256xf32> to vector<1x128xf32>
    %48 = vector.extract_strided_slice %46 {offsets = [0, 128], sizes = [1, 128], strides = [1, 1]} : vector<1x256xf32> to vector<1x128xf32>
    %49 = vector.extract_strided_slice %39 {offsets = [0, 256], sizes = [1, 128], strides = [1, 1]} : vector<1x384xf32> to vector<1x128xf32>
    %50 = arith.addf %49, %12 : vector<1x128xf32>
    %51 = arith.mulf %47, %50 : vector<1x128xf32>
    %52 = arith.addf %11, %51 : vector<1x128xf32>
    %53 = math.tanh %52 : vector<1x128xf32>
    %54 = arith.subf %35, %53 : vector<1x128xf32>
    %55 = arith.mulf %48, %54 : vector<1x128xf32>
    %56 = arith.addf %53, %55 : vector<1x128xf32>
    %cst_16 = arith.constant 0.000000e+00 : f32
    %57 = vector.broadcast %cst_16 : f32 to vector<1x128xf32>
    %58 = arith.maximumf %56, %57 : vector<1x128xf32>
    %59 = arith.truncf %56 : vector<1x128xf32> to vector<1x128xbf16>
    %cst_17 = arith.constant dense<0.000000e+00> : vector<1x384xf32>
    %60 = tpu.matmul %59, %2, %cst_17 {dimension_numbers = #tpu.dot_dimension_numbers<[1], [0], [0], [1], [0, 0, 1, 1], [], []>} : vector<1x128xbf16>, vector<128x384xbf16>, vector<1x384xf32> -> vector<1x384xf32>
    %61 = vector.extract_strided_slice %60 {offsets = [0, 0], sizes = [1, 256], strides = [1, 1]} : vector<1x384xf32> to vector<1x256xf32>
    %62 = arith.addf %10, %61 : vector<1x256xf32>
    %63 = arith.negf %62 : vector<1x256xf32>
    %64 = math.exp %63 : vector<1x256xf32>
    %cst_18 = arith.constant 1.000000e+00 : f32
    %65 = vector.broadcast %cst_18 : f32 to vector<1x256xf32>
    %66 = arith.addf %65, %64 : vector<1x256xf32>
    %67 = arith.divf %65, %66 : vector<1x256xf32>
    %68 = vector.extract_strided_slice %67 {offsets = [0, 0], sizes = [1, 128], strides = [1, 1]} : vector<1x256xf32> to vector<1x128xf32>
    %69 = vector.extract_strided_slice %67 {offsets = [0, 128], sizes = [1, 128], strides = [1, 1]} : vector<1x256xf32> to vector<1x128xf32>
    %70 = vector.extract_strided_slice %60 {offsets = [0, 256], sizes = [1, 128], strides = [1, 1]} : vector<1x384xf32> to vector<1x128xf32>
    %71 = arith.addf %70, %12 : vector<1x128xf32>
    %72 = arith.mulf %68, %71 : vector<1x128xf32>
    %73 = arith.addf %11, %72 : vector<1x128xf32>
    %74 = math.tanh %73 : vector<1x128xf32>
    %75 = arith.subf %56, %74 : vector<1x128xf32>
    %76 = arith.mulf %69, %75 : vector<1x128xf32>
    %77 = arith.addf %74, %76 : vector<1x128xf32>
    %cst_19 = arith.constant 0.000000e+00 : f32
    %78 = vector.broadcast %cst_19 : f32 to vector<1x128xf32>
    %79 = arith.maximumf %77, %78 : vector<1x128xf32>
    %80 = arith.truncf %77 : vector<1x128xf32> to vector<1x128xbf16>
    %cst_20 = arith.constant dense<0.000000e+00> : vector<1x384xf32>
    %81 = tpu.matmul %80, %2, %cst_20 {dimension_numbers = #tpu.dot_dimension_numbers<[1], [0], [0], [1], [0, 0, 1, 1], [], []>} : vector<1x128xbf16>, vector<128x384xbf16>, vector<1x384xf32> -> vector<1x384xf32>
    %82 = vector.extract_strided_slice %81 {offsets = [0, 0], sizes = [1, 256], strides = [1, 1]} : vector<1x384xf32> to vector<1x256xf32>
    %83 = arith.addf %10, %82 : vector<1x256xf32>
    %84 = arith.negf %83 : vector<1x256xf32>
    %85 = math.exp %84 : vector<1x256xf32>
    %cst_21 = arith.constant 1.000000e+00 : f32
    %86 = vector.broadcast %cst_21 : f32 to vector<1x256xf32>
    %87 = arith.addf %86, %85 : vector<1x256xf32>
    %88 = arith.divf %86, %87 : vector<1x256xf32>
    %89 = vector.extract_strided_slice %88 {offsets = [0, 0], sizes = [1, 128], strides = [1, 1]} : vector<1x256xf32> to vector<1x128xf32>
    %90 = vector.extract_strided_slice %88 {offsets = [0, 128], sizes = [1, 128], strides = [1, 1]} : vector<1x256xf32> to vector<1x128xf32>
    %91 = vector.extract_strided_slice %81 {offsets = [0, 256], sizes = [1, 128], strides = [1, 1]} : vector<1x384xf32> to vector<1x128xf32>
    %92 = arith.addf %91, %12 : vector<1x128xf32>
    %93 = arith.mulf %89, %92 : vector<1x128xf32>
    %94 = arith.addf %11, %93 : vector<1x128xf32>
    %95 = math.tanh %94 : vector<1x128xf32>
    %96 = arith.subf %77, %95 : vector<1x128xf32>
    %97 = arith.mulf %90, %96 : vector<1x128xf32>
    %98 = arith.addf %95, %97 : vector<1x128xf32>
    %cst_22 = arith.constant 0.000000e+00 : f32
    %99 = vector.broadcast %cst_22 : f32 to vector<1x128xf32>
    %100 = arith.maximumf %98, %99 : vector<1x128xf32>
    %101 = arith.truncf %98 : vector<1x128xf32> to vector<1x128xbf16>
    %cst_23 = arith.constant dense<0.000000e+00> : vector<1x384xf32>
    %102 = tpu.matmul %101, %2, %cst_23 {dimension_numbers = #tpu.dot_dimension_numbers<[1], [0], [0], [1], [0, 0, 1, 1], [], []>} : vector<1x128xbf16>, vector<128x384xbf16>, vector<1x384xf32> -> vector<1x384xf32>
    %103 = vector.extract_strided_slice %102 {offsets = [0, 0], sizes = [1, 256], strides = [1, 1]} : vector<1x384xf32> to vector<1x256xf32>
    %104 = arith.addf %10, %103 : vector<1x256xf32>
    %105 = arith.negf %104 : vector<1x256xf32>
    %106 = math.exp %105 : vector<1x256xf32>
    %cst_24 = arith.constant 1.000000e+00 : f32
    %107 = vector.broadcast %cst_24 : f32 to vector<1x256xf32>
    %108 = arith.addf %107, %106 : vector<1x256xf32>
    %109 = arith.divf %107, %108 : vector<1x256xf32>
    %110 = vector.extract_strided_slice %109 {offsets = [0, 0], sizes = [1, 128], strides = [1, 1]} : vector<1x256xf32> to vector<1x128xf32>
    %111 = vector.extract_strided_slice %109 {offsets = [0, 128], sizes = [1, 128], strides = [1, 1]} : vector<1x256xf32> to vector<1x128xf32>
    %112 = vector.extract_strided_slice %102 {offsets = [0, 256], sizes = [1, 128], strides = [1, 1]} : vector<1x384xf32> to vector<1x128xf32>
    %113 = arith.addf %112, %12 : vector<1x128xf32>
    %114 = arith.mulf %110, %113 : vector<1x128xf32>
    %115 = arith.addf %11, %114 : vector<1x128xf32>
    %116 = math.tanh %115 : vector<1x128xf32>
    %117 = arith.subf %98, %116 : vector<1x128xf32>
    %118 = arith.mulf %111, %117 : vector<1x128xf32>
    %119 = arith.addf %116, %118 : vector<1x128xf32>
    %cst_25 = arith.constant 0.000000e+00 : f32
    %120 = vector.broadcast %cst_25 : f32 to vector<1x128xf32>
    %121 = arith.maximumf %119, %120 : vector<1x128xf32>
    %122 = arith.truncf %119 : vector<1x128xf32> to vector<1x128xbf16>
    %cst_26 = arith.constant dense<0.000000e+00> : vector<1x384xf32>
    %123 = tpu.matmul %122, %2, %cst_26 {dimension_numbers = #tpu.dot_dimension_numbers<[1], [0], [0], [1], [0, 0, 1, 1], [], []>} : vector<1x128xbf16>, vector<128x384xbf16>, vector<1x384xf32> -> vector<1x384xf32>
    %124 = vector.extract_strided_slice %123 {offsets = [0, 0], sizes = [1, 256], strides = [1, 1]} : vector<1x384xf32> to vector<1x256xf32>
    %125 = arith.addf %10, %124 : vector<1x256xf32>
    %126 = arith.negf %125 : vector<1x256xf32>
    %127 = math.exp %126 : vector<1x256xf32>
    %cst_27 = arith.constant 1.000000e+00 : f32
    %128 = vector.broadcast %cst_27 : f32 to vector<1x256xf32>
    %129 = arith.addf %128, %127 : vector<1x256xf32>
    %130 = arith.divf %128, %129 : vector<1x256xf32>
    %131 = vector.extract_strided_slice %130 {offsets = [0, 0], sizes = [1, 128], strides = [1, 1]} : vector<1x256xf32> to vector<1x128xf32>
    %132 = vector.extract_strided_slice %130 {offsets = [0, 128], sizes = [1, 128], strides = [1, 1]} : vector<1x256xf32> to vector<1x128xf32>
    %133 = vector.extract_strided_slice %123 {offsets = [0, 256], sizes = [1, 128], strides = [1, 1]} : vector<1x384xf32> to vector<1x128xf32>
    %134 = arith.addf %133, %12 : vector<1x128xf32>
    %135 = arith.mulf %131, %134 : vector<1x128xf32>
    %136 = arith.addf %11, %135 : vector<1x128xf32>
    %137 = math.tanh %136 : vector<1x128xf32>
    %138 = arith.subf %119, %137 : vector<1x128xf32>
    %139 = arith.mulf %132, %138 : vector<1x128xf32>
    %140 = arith.addf %137, %139 : vector<1x128xf32>
    %cst_28 = arith.constant 0.000000e+00 : f32
    %141 = vector.broadcast %cst_28 : f32 to vector<1x128xf32>
    %142 = arith.maximumf %140, %141 : vector<1x128xf32>
    %143 = arith.truncf %140 : vector<1x128xf32> to vector<1x128xbf16>
    %cst_29 = arith.constant dense<0.000000e+00> : vector<1x384xf32>
    %144 = tpu.matmul %143, %2, %cst_29 {dimension_numbers = #tpu.dot_dimension_numbers<[1], [0], [0], [1], [0, 0, 1, 1], [], []>} : vector<1x128xbf16>, vector<128x384xbf16>, vector<1x384xf32> -> vector<1x384xf32>
    %145 = vector.extract_strided_slice %144 {offsets = [0, 0], sizes = [1, 256], strides = [1, 1]} : vector<1x384xf32> to vector<1x256xf32>
    %146 = arith.addf %10, %145 : vector<1x256xf32>
    %147 = arith.negf %146 : vector<1x256xf32>
    %148 = math.exp %147 : vector<1x256xf32>
    %cst_30 = arith.constant 1.000000e+00 : f32
    %149 = vector.broadcast %cst_30 : f32 to vector<1x256xf32>
    %150 = arith.addf %149, %148 : vector<1x256xf32>
    %151 = arith.divf %149, %150 : vector<1x256xf32>
    %152 = vector.extract_strided_slice %151 {offsets = [0, 0], sizes = [1, 128], strides = [1, 1]} : vector<1x256xf32> to vector<1x128xf32>
    %153 = vector.extract_strided_slice %151 {offsets = [0, 128], sizes = [1, 128], strides = [1, 1]} : vector<1x256xf32> to vector<1x128xf32>
    %154 = vector.extract_strided_slice %144 {offsets = [0, 256], sizes = [1, 128], strides = [1, 1]} : vector<1x384xf32> to vector<1x128xf32>
    %155 = arith.addf %154, %12 : vector<1x128xf32>
    %156 = arith.mulf %152, %155 : vector<1x128xf32>
    %157 = arith.addf %11, %156 : vector<1x128xf32>
    %158 = math.tanh %157 : vector<1x128xf32>
    %159 = arith.subf %140, %158 : vector<1x128xf32>
    %160 = arith.mulf %153, %159 : vector<1x128xf32>
    %161 = arith.addf %158, %160 : vector<1x128xf32>
    %cst_31 = arith.constant 0.000000e+00 : f32
    %162 = vector.broadcast %cst_31 : f32 to vector<1x128xf32>
    %163 = arith.maximumf %161, %162 : vector<1x128xf32>
    %164 = arith.truncf %161 : vector<1x128xf32> to vector<1x128xbf16>
    %cst_32 = arith.constant dense<0.000000e+00> : vector<1x384xf32>
    %165 = tpu.matmul %164, %2, %cst_32 {dimension_numbers = #tpu.dot_dimension_numbers<[1], [0], [0], [1], [0, 0, 1, 1], [], []>} : vector<1x128xbf16>, vector<128x384xbf16>, vector<1x384xf32> -> vector<1x384xf32>
    %166 = vector.extract_strided_slice %165 {offsets = [0, 0], sizes = [1, 256], strides = [1, 1]} : vector<1x384xf32> to vector<1x256xf32>
    %167 = arith.addf %10, %166 : vector<1x256xf32>
    %168 = arith.negf %167 : vector<1x256xf32>
    %169 = math.exp %168 : vector<1x256xf32>
    %cst_33 = arith.constant 1.000000e+00 : f32
    %170 = vector.broadcast %cst_33 : f32 to vector<1x256xf32>
    %171 = arith.addf %170, %169 : vector<1x256xf32>
    %172 = arith.divf %170, %171 : vector<1x256xf32>
    %173 = vector.extract_strided_slice %172 {offsets = [0, 0], sizes = [1, 128], strides = [1, 1]} : vector<1x256xf32> to vector<1x128xf32>
    %174 = vector.extract_strided_slice %172 {offsets = [0, 128], sizes = [1, 128], strides = [1, 1]} : vector<1x256xf32> to vector<1x128xf32>
    %175 = vector.extract_strided_slice %165 {offsets = [0, 256], sizes = [1, 128], strides = [1, 1]} : vector<1x384xf32> to vector<1x128xf32>
    %176 = arith.addf %175, %12 : vector<1x128xf32>
    %177 = arith.mulf %173, %176 : vector<1x128xf32>
    %178 = arith.addf %11, %177 : vector<1x128xf32>
    %179 = math.tanh %178 : vector<1x128xf32>
    %180 = arith.subf %161, %179 : vector<1x128xf32>
    %181 = arith.mulf %174, %180 : vector<1x128xf32>
    %182 = arith.addf %179, %181 : vector<1x128xf32>
    %cst_34 = arith.constant 0.000000e+00 : f32
    %183 = vector.broadcast %cst_34 : f32 to vector<1x128xf32>
    %184 = arith.maximumf %182, %183 : vector<1x128xf32>
    %185 = tpu.concatenate %37, %58, %79, %100, %121, %142, %163, %184 in 0 : vector<1x128xf32>, vector<1x128xf32>, vector<1x128xf32>, vector<1x128xf32>, vector<1x128xf32>, vector<1x128xf32>, vector<1x128xf32>, vector<1x128xf32> -> vector<8x128xf32>
    %186 = arith.truncf %185 : vector<8x128xf32> to vector<8x128xbf16>
    %c0_35 = arith.constant 0 : index
    %c0_36 = arith.constant 0 : index
    %187 = vector.load %arg6[%c0_35, %c0_36] : memref<128x8xbf16, #tpu.memory_space<vmem>>, vector<128x8xbf16>
    %cst_37 = arith.constant dense<0.000000e+00> : vector<8x8xf32>
    %188 = tpu.matmul %186, %187, %cst_37 {dimension_numbers = #tpu.dot_dimension_numbers<[1], [0], [0], [1], [0, 0, 1, 1], [], []>} : vector<8x128xbf16>, vector<128x8xbf16>, vector<8x8xf32> -> vector<8x8xf32>
    %c0_38 = arith.constant 0 : index
    %c0_39 = arith.constant 0 : index
    %189 = vector.load %arg7[%c0_38, %c0_39] : memref<1x8xf32, #tpu.memory_space<vmem>>, vector<1x8xf32>
    %190 = vector.broadcast %189 : vector<1x8xf32> to vector<8x8xf32>
    %191 = arith.addf %188, %190 : vector<8x8xf32>
    %c0_40 = arith.constant 0 : index
    %c0_41 = arith.constant 0 : index
    %192 = vector.load %arg8[%c0_40, %c0_41] : memref<8x8xf32, #tpu.memory_space<vmem>>, vector<8x8xf32>
    tpu.vector_store %arg8[%c0_40, %c0_41], %191 {strides = array<i32>} : memref<8x8xf32, #tpu.memory_space<vmem>>, vector<8x8xf32>,
    %c0_i32 = arith.constant 0 : i32
    %193 = arith.cmpi eq, %0, %c0_i32 : i32
    %194 = arith.extui %193 : i1 to i32
    %c0_i32_42 = arith.constant 0 : i32
    %195 = arith.cmpi ne, %194, %c0_i32_42 : i32
    scf.if %195 {
      %cst_43 = arith.constant 0.000000e+00 : f32
      %196 = vector.broadcast %cst_43 : f32 to vector<1x8xf32>
      %c0_44 = arith.constant 0 : index
      %c0_45 = arith.constant 0 : index
      %197 = vector.load %arg8[%c0_44, %c0_45] : memref<8x8xf32, #tpu.memory_space<vmem>>, vector<1x8xf32>
      tpu.vector_store %arg8[%c0_44, %c0_45], %196 {strides = array<i32>} : memref<8x8xf32, #tpu.memory_space<vmem>>, vector<1x8xf32>,
    } else {
    }
    return
  }
}

</mosaic_0001>

<llo_original>
// kernel: gru_rnn_forward.1
$region0: #{gru_rnn_forward.1}
  #allocation0 [shape = 'u32[]', space=smem, size = 0x4, offset = 0x4, fixed_abs, tag = 'smem constant byte address 0x4 - core index']
  #allocation1 [shape = 'u32[144,128]{1,0:T(1,128)}', space=vmem, size = 0x12000, scoped, tag = 'internal scratch']
  #allocation2 [shape = 's32[1]{0:T(128)S(6)}', space=smem, size = 0x200, scoped, tag = 'scoped memory for gru_rnn_forward.1']
  %s0 = inlined_call_operand.<no memory space> [shape: s32[1], index: 0, kind: input, shape index: {}]
  %s1 = inlined_call_operand.vmem [shape: f32[1,16], index: 1, kind: input, shape index: {}]
  %s2 = inlined_call_operand.vmem [shape: f32[16,384], index: 2, kind: input, shape index: {}]
  %s3 = inlined_call_operand.hbm [shape: bf16[128,384], index: 3, kind: input, shape index: {}]
  %s4 = inlined_call_operand.vmem [shape: f32[1,384], index: 4, kind: input, shape index: {}]
  %s5 = inlined_call_operand.vmem [shape: f32[1,384], index: 5, kind: input, shape index: {}]
  %s6 = inlined_call_operand.vmem [shape: bf16[128,8], index: 6, kind: input, shape index: {}]
  %s7 = inlined_call_operand.vmem [shape: f32[1,8], index: 7, kind: input, shape index: {}]
  %s8 = inlined_call_operand.hbm [shape: f32[8,8], index: 8, kind: output, shape index: {}]
  %s9 = sld [smem:[#allocation0]]
  $region50: #{gru_rnn_forward.1} parent=0
    _
  %s11 = ssub.s32 1, %s9
  %s12 = scalar_select 0, %s11, %s9
  %13 = sst [smem:[#allocation2]] %s0
  $region1: #{gru_rnn_forward.1} parent=0
    #allocation3 [shape = 'u8[98304]{0}', space=vmem, size = 0x18000, scoped, tag = 'input window, operand 3, single buffered']
    #allocation4 [shape = 's32[1]{0}', space=sflag, size = 0x4, scoped, tag = 'scoped memory for gru_rnn_forward.1']
    #allocation5 [shape = 's32[1]{0}', space=sflag, size = 0x4, scoped, tag = 'scoped memory for gru_rnn_forward.1']
    #allocation6 [shape = 'u8[4096]{0}', space=vmem, size = 0x1000, scoped, tag = 'output window, operand 0, single buffered']
    %14 = vsyncpa [#allocation4], 0
    %15 = vsyncpa [#allocation5], 0
    // Predicated region
    $region2: #{gru_rnn_forward.1} parent=1 // pred_check
      _
    $region3: #{gru_rnn_forward.1} parent=1 // pred_check_branch
      %17 = sbr.rel (0) target = $region5
    $region4: #{gru_rnn_forward.1} parent=1 // pred_region
      _
    $region5: #{gru_rnn_forward.1} parent=1 // pred_fallthru
      _
    // Predicated region
    $region6: #{gru_rnn_forward.1} parent=1 // pred_check
      _
    $region7: #{gru_rnn_forward.1} parent=1 // pred_check_branch
      %19 = sbr.rel (0) target = $region9
    $region8: #{gru_rnn_forward.1} parent=1 // pred_region
      _
    $region9: #{gru_rnn_forward.1} parent=1 // pred_fallthru
      _
    // Predicated region
    $region10: #{gru_rnn_forward.1} parent=1 // pred_check
      _
    $region11: #{gru_rnn_forward.1} parent=1 // pred_check_branch
      %21 = sbr.rel (0) target = $region13
    $region12: #{gru_rnn_forward.1} parent=1 // pred_region
      _
    $region13: #{gru_rnn_forward.1} parent=1 // pred_fallthru
      _
    // Predicated region
    $region14: #{gru_rnn_forward.1} parent=1 // pred_check
      _
    $region15: #{gru_rnn_forward.1} parent=1 // pred_check_branch
      %23 = sbr.rel (0) target = $region17
    $region16: #{gru_rnn_forward.1} parent=1 // pred_region
      %s25 = ssub.s32 3072, 3072
      %26 = vsyncadd [#allocation4], %s25
      %s27 = sshll.u32 [#allocation3], 4
      %s28 = int_to_ptr.vmem [resolvable:$true] %s27
      %33 = dma.hbm_to_vmem [thread:$0]  %s3, 3072, %s28, [#allocation4], 192, 192, 12
    $region17: #{gru_rnn_forward.1} parent=1 // pred_fallthru
      _
    // Predicated region
    $region18: #{gru_rnn_forward.1} parent=1 // pred_check
      _
    $region19: #{gru_rnn_forward.1} parent=1 // pred_check_branch
      %35 = sbr.rel (0) target = $region21
    $region20: #{gru_rnn_forward.1} parent=1 // pred_region
      _
    $region21: #{gru_rnn_forward.1} parent=1 // pred_fallthru
      _
    // Predicated region
    $region22: #{gru_rnn_forward.1} parent=1 // pred_check
      _
    $region23: #{gru_rnn_forward.1} parent=1 // pred_check_branch
      %37 = sbr.rel (0) target = $region25
    $region24: #{gru_rnn_forward.1} parent=1 // pred_region
      _
    $region25: #{gru_rnn_forward.1} parent=1 // pred_fallthru
      _
    // Predicated region
    $region26: #{gru_rnn_forward.1} parent=1 // pred_check
      _
    $region27: #{gru_rnn_forward.1} parent=1 // pred_check_branch
      %39 = sbr.rel (0) target = $region29
    $region28: #{gru_rnn_forward.1} parent=1 // pred_region
      _
    $region29: #{gru_rnn_forward.1} parent=1 // pred_fallthru
      _
    // Predicated region
    $region30: #{gru_rnn_forward.1} parent=1 // pred_check
      _
    $region31: #{gru_rnn_forward.1} parent=1 // pred_check_branch
      %41 = sbr.rel (0) target = $region33
    $region32: #{gru_rnn_forward.1} parent=1 // pred_region
      _
    $region33: #{gru_rnn_forward.1} parent=1 // pred_fallthru
      _
    // Predicated region
    $region34: #{gru_rnn_forward.1} parent=1 // pred_check
      _
    $region35: #{gru_rnn_forward.1} parent=1 // pred_check_branch
      %43 = sbr.rel (0) target = $region37
    $region36: #{gru_rnn_forward.1} parent=1 // pred_region
      %44 = dma.done [#allocation4], 3072
    $region37: #{gru_rnn_forward.1} parent=1 // pred_fallthru
      _
    %s46 = sld [smem:[#allocation2]]
    %v47 = vld [vmem:[%s1] sm:$0x1]
    %v48 = vld [vmem:[#allocation3] sm:$0xff]
    %v49 = vld [vmem:[#allocation3 + $0x8] sm:$0xf]
    %v50 = vld [vmem:[#allocation3 + $0xc] sm:$0xff]
    %v51 = vld [vmem:[#allocation3 + $0x14] sm:$0xf]
    %v52 = vld [vmem:[#allocation3 + $0x18] sm:$0xff]
    %v53 = vld [vmem:[#allocation3 + $0x20] sm:$0xf]
    %v54 = vld [vmem:[#allocation3 + $0x24] sm:$0xff]
    %v55 = vld [vmem:[#allocation3 + $0x2c] sm:$0xf]
    %v56 = vld [vmem:[#allocation3 + $0x30] sm:$0xff]
    %v57 = vld [vmem:[#allocation3 + $0x38] sm:$0xf]
    %v58 = vld [vmem:[#allocation3 + $0x3c] sm:$0xff]
    %v59 = vld [vmem:[#allocation3 + $0x44] sm:$0xf]
    %v60 = vld [vmem:[#allocation3 + $0x48] sm:$0xff]
    %v61 = vld [vmem:[#allocation3 + $0x50] sm:$0xf]
    %v62 = vld [vmem:[#allocation3 + $0x54] sm:$0xff]
    %v63 = vld [vmem:[#allocation3 + $0x5c] sm:$0xf]
    %v64 = vld [vmem:[#allocation3 + $0x60] sm:$0xff]
    %v65 = vld [vmem:[#allocation3 + $0x68] sm:$0xf]
    %v66 = vld [vmem:[#allocation3 + $0x6c] sm:$0xff]
    %v67 = vld [vmem:[#allocation3 + $0x74] sm:$0xf]
    %v68 = vld [vmem:[#allocation3 + $0x78] sm:$0xff]
    %v69 = vld [vmem:[#allocation3 + $0x80] sm:$0xf]
    %v70 = vld [vmem:[#allocation3 + $0x84] sm:$0xff]
    %v71 = vld [vmem:[#allocation3 + $0x8c] sm:$0xf]
    %v72 = vld [vmem:[#allocation3 + $0x90] sm:$0xff]
    %v73 = vld [vmem:[#allocation3 + $0x98] sm:$0xf]
    %v74 = vld [vmem:[#allocation3 + $0x9c] sm:$0xff]
    %v75 = vld [vmem:[#allocation3 + $0xa4] sm:$0xf]
    %v76 = vld [vmem:[#allocation3 + $0xa8] sm:$0xff]
    %v77 = vld [vmem:[#allocation3 + $0xb0] sm:$0xf]
    %v78 = vld [vmem:[#allocation3 + $0xb4] sm:$0xff]
    %v79 = vld [vmem:[#allocation3 + $0xbc] sm:$0xf]
    %v80 = vld [vmem:[%s5] sm:$0x7]
    %v81 = vld [vmem:[%s2] sm:$0xff]
    %v82 = vld [vmem:[%s2 + $0x8] sm:$0xff]
    %v83 = vld [vmem:[%s2 + $0x10] sm:$0xff]
    %v84 = vld [vmem:[%s2 + $0x18] sm:$0xff]
    %v85 = vld [vmem:[%s2 + $0x20] sm:$0xff]
    %v86 = vld [vmem:[%s2 + $0x28] sm:$0xff]
    %v87 = vld [vmem:[%s4] sm:$0x7]
    %v89 = vlaneseq
    %v90 = vshrl.u32 %v89, 7
    %v91 = vsub.s32 0, %v90
    %v92 = vrot.slane %v87, %v91
    %v93 = vlaneseq
    %v94 = vshrl.u32 %v93, 7
    %v95 = vsub.s32 1, %v94
    %v96 = vrot.slane %v87, %v95
    %v97 = vlaneseq
    %v98 = vshrl.u32 %v97, 7
    %v99 = vsub.s32 2, %v98
    %v100 = vrot.slane %v87, %v99
    %vm104 = vcmask 130048
    %v106 = vsel %vm104, %v47, 0
    %108 = vmatprep.subr.mxu0 %v82
    %109 = vmatpush1.msra.mxu0 %v81
    %110 = vmatprep.subr.mxu0 %v85
    %111 = vmatpush1.msra.mxu0 %v84
    %112 = vmatprep.subr.mxu0 0.0
    %113 = vmatpush1.msra.mxu0 0.0
    %114 = vmatprep.subr.mxu0 0.0
    %115 = vmatpush1.msra.mxu0 0.0
    %116 = vmatprep.subr.mxu0 0.0
    %117 = vmatpush1.msra.mxu0 0.0
    %118 = vmatprep.subr.mxu0 0.0
    %119 = vmatpush1.msra.mxu0 0.0
    %120 = vmatprep.subr.mxu0 0.0
    %121 = vmatpush1.msra.mxu0 0.0
    %122 = vmatprep.subr.mxu0 0.0
    %123 = vmatpush1.msra.mxu0 0.0
    %124 = vmatprep.subr.mxu0 0.0
    %125 = vmatpush1.msra.mxu0 0.0
    %126 = vmatprep.subr.mxu0 0.0
    %127 = vmatpush1.msra.mxu0 0.0
    %128 = vmatprep.subr.mxu0 0.0
    %129 = vmatpush1.msra.mxu0 0.0
    %130 = vmatprep.subr.mxu0 0.0
    %131 = vmatpush1.msra.mxu0 0.0
    %132 = vmatprep.subr.mxu0 0.0
    %133 = vmatpush1.msra.mxu0 0.0
    %134 = vmatprep.subr.mxu0 0.0
    %135 = vmatpush1.msra.mxu0 0.0
    %136 = vmatprep.subr.mxu0 0.0
    %137 = vmatpush1.msra.mxu0 0.0
    %138 = vmatprep.subr.mxu0 0.0
    %139 = vmatpush1.msra.mxu0 0.0
    %140 = vmatprep.subr.mxu0 0.0
    %141 = vmatpush1.msra.mxu0 0.0
    %142 = vmatprep.subr.mxu0 0.0
    %143 = vmatpush1.msra.mxu0 0.0
    %144 = vmatprep.subr.mxu0 0.0
    %145 = vmatpush1.msra.mxu0 0.0
    %146 = vmatprep.subr.mxu0 0.0
    %147 = vmatpush1.msra.mxu0 0.0
    %148 = vmatprep.subr.mxu0 0.0
    %149 = vmatpush1.msra.mxu0 0.0
    %150 = vmatprep.subr.mxu0 0.0
    %151 = vmatpush1.msra.mxu0 0.0
    %152 = vmatprep.subr.mxu0 0.0
    %153 = vmatpush1.msra.mxu0 0.0
    %154 = vmatprep.subr.mxu0 0.0
    %155 = vmatpush1.msra.mxu0 0.0
    %156 = vmatprep.subr.mxu0 0.0
    %157 = vmatpush1.msra.mxu0 0.0
    %158 = vmatprep.subr.mxu0 0.0
    %159 = vmatpush1.msra.mxu0 0.0
    %160 = vmatprep.subr.mxu0 0.0
    %161 = vmatpush1.msra.mxu0 0.0
    %162 = vmatprep.subr.mxu0 0.0
    %163 = vmatpush1.msra.mxu0 0.0
    %164 = vmatprep.subr.mxu0 0.0
    %165 = vmatpush1.msra.mxu0 0.0
    %166 = vmatprep.subr.mxu0 0.0
    %167 = vmatpush1.msra.mxu0 0.0
    %168 = vmatprep.subr.mxu0 0.0
    %169 = vmatpush1.msra.mxu0 0.0
    %170 = vmatprep.subr.mxu0 0.0
    %171 = vmatpush1.msra.mxu0 0.0
    %172 = vmatprep.mubr.f32.mxu0 0.0
    %173 = vmatmul.mubr.f32.gmra.mrb[0].mxu0 %v106
    %v174 = vpop.f32.mrb[0].mxu0
    %v175 = vadd.f32 %v92, %v174
    %v176 = vpop.f32.mrb[0].mxu0
    %v177 = vadd.f32 %v96, %v176
    %178 = vdwg.mxu0
    %179 = vmatprep.subr.mxu0 0.0
    %180 = vmatpush1.msra.mxu0 %v83
    %181 = vmatprep.subr.mxu0 0.0
    %182 = vmatpush1.msra.mxu0 %v86
    %183 = vmatprep.subr.mxu0 0.0
    %184 = vmatpush1.msra.mxu0 0.0
    %185 = vmatprep.subr.mxu0 0.0
    %186 = vmatpush1.msra.mxu0 0.0
    %187 = vmatprep.subr.mxu0 0.0
    %188 = vmatpush1.msra.mxu0 0.0
    %189 = vmatprep.subr.mxu0 0.0
    %190 = vmatpush1.msra.mxu0 0.0
    %191 = vmatprep.subr.mxu0 0.0
    %192 = vmatpush1.msra.mxu0 0.0
    %193 = vmatprep.subr.mxu0 0.0
    %194 = vmatpush1.msra.mxu0 0.0
    %195 = vmatprep.subr.mxu0 0.0
    %196 = vmatpush1.msra.mxu0 0.0
    %197 = vmatprep.subr.mxu0 0.0
    %198 = vmatpush1.msra.mxu0 0.0
    %199 = vmatprep.subr.mxu0 0.0
    %200 = vmatpush1.msra.mxu0 0.0
    %201 = vmatprep.subr.mxu0 0.0
    %202 = vmatpush1.msra.mxu0 0.0
    %203 = vmatprep.subr.mxu0 0.0
    %204 = vmatpush1.msra.mxu0 0.0
    %205 = vmatprep.subr.mxu0 0.0
    %206 = vmatpush1.msra.mxu0 0.0
    %207 = vmatprep.subr.mxu0 0.0
    %208 = vmatpush1.msra.mxu0 0.0
    %209 = vmatprep.subr.mxu0 0.0
    %210 = vmatpush1.msra.mxu0 0.0
    %211 = vmatprep.subr.mxu0 0.0
    %212 = vmatpush1.msra.mxu0 0.0
    %213 = vmatprep.subr.mxu0 0.0
    %214 = vmatpush1.msra.mxu0 0.0
    %215 = vmatprep.subr.mxu0 0.0
    %216 = vmatpush1.msra.mxu0 0.0
    %217 = vmatprep.subr.mxu0 0.0
    %218 = vmatpush1.msra.mxu0 0.0
    %219 = vmatprep.subr.mxu0 0.0
    %220 = vmatpush1.msra.mxu0 0.0
    %221 = vmatprep.subr.mxu0 0.0
    %222 = vmatpush1.msra.mxu0 0.0
    %223 = vmatprep.subr.mxu0 0.0
    %224 = vmatpush1.msra.mxu0 0.0
    %225 = vmatprep.subr.mxu0 0.0
    %226 = vmatpush1.msra.mxu0 0.0
    %227 = vmatprep.subr.mxu0 0.0
    %228 = vmatpush1.msra.mxu0 0.0
    %229 = vmatprep.subr.mxu0 0.0
    %230 = vmatpush1.msra.mxu0 0.0
    %231 = vmatprep.subr.mxu0 0.0
    %232 = vmatpush1.msra.mxu0 0.0
    %233 = vmatprep.subr.mxu0 0.0
    %234 = vmatpush1.msra.mxu0 0.0
    %235 = vmatprep.subr.mxu0 0.0
    %236 = vmatpush1.msra.mxu0 0.0
    %237 = vmatprep.subr.mxu0 0.0
    %238 = vmatpush1.msra.mxu0 0.0
    %239 = vmatprep.subr.mxu0 0.0
    %240 = vmatpush1.msra.mxu0 0.0
    %241 = vmatprep.subr.mxu0 0.0
    %242 = vmatpush1.msra.mxu0 0.0
    %243 = vmatprep.mubr.f32.mxu0 0.0
    %244 = vmatmul.mubr.f32.gmra.mrb[0].mxu0 %v106
    %v245 = vpop.f32.mrb[0].mxu0
    %v246 = vadd.f32 %v100, %v245
    %v247 = vpop.f32.mrb[0].mxu0
    %248 = vdwg.mxu0
    %v250 = vlaneseq
    %v251 = vshrl.u32 %v250, 7
    %v252 = vsub.s32 0, %v251
    %v253 = vrot.slane %v80, %v252
    %v254 = vlaneseq
    %v255 = vshrl.u32 %v254, 7
    %v256 = vsub.s32 1, %v255
    %v257 = vrot.slane %v80, %v256
    %v260 = vadd.f32 %v175, %v253
    %v261 = vadd.f32 %v177, %v257
    %v294 = vunpack.c.l.b16 %v48
    %v295 = vunpack.c.h.b16 %v48
    %v296 = vunpack.c.l.b16 %v49
    %v297 = vunpack.c.l.b16 %v50
    %v298 = vunpack.c.h.b16 %v50
    %v299 = vunpack.c.l.b16 %v51
    %v300 = vunpack.c.l.b16 %v52
    %v301 = vunpack.c.h.b16 %v52
    %v302 = vunpack.c.l.b16 %v53
    %v303 = vunpack.c.l.b16 %v54
    %v304 = vunpack.c.h.b16 %v54
    %v305 = vunpack.c.l.b16 %v55
    %v306 = vunpack.c.l.b16 %v56
    %v307 = vunpack.c.h.b16 %v56
    %v308 = vunpack.c.l.b16 %v57
    %v309 = vunpack.c.l.b16 %v58
    %v310 = vunpack.c.h.b16 %v58
    %v311 = vunpack.c.l.b16 %v59
    %v312 = vunpack.c.l.b16 %v60
    %v313 = vunpack.c.h.b16 %v60
    %v314 = vunpack.c.l.b16 %v61
    %v315 = vunpack.c.l.b16 %v62
    %v316 = vunpack.c.h.b16 %v62
    %v317 = vunpack.c.l.b16 %v63
    %v318 = vunpack.c.l.b16 %v64
    %v319 = vunpack.c.h.b16 %v64
    %v320 = vunpack.c.l.b16 %v65
    %v321 = vunpack.c.l.b16 %v66
    %v322 = vunpack.c.h.b16 %v66
    %v323 = vunpack.c.l.b16 %v67
    %v324 = vunpack.c.l.b16 %v68
    %v325 = vunpack.c.h.b16 %v68
    %v326 = vunpack.c.l.b16 %v69
    %v327 = vunpack.c.l.b16 %v70
    %v328 = vunpack.c.h.b16 %v70
    %v329 = vunpack.c.l.b16 %v71
    %v330 = vunpack.c.l.b16 %v72
    %v331 = vunpack.c.h.b16 %v72
    %v332 = vunpack.c.l.b16 %v73
    %v333 = vunpack.c.l.b16 %v74
    %v334 = vunpack.c.h.b16 %v74
    %v335 = vunpack.c.l.b16 %v75
    %v336 = vunpack.c.l.b16 %v76
    %v337 = vunpack.c.h.b16 %v76
    %v338 = vunpack.c.l.b16 %v77
    %v339 = vunpack.c.l.b16 %v78
    %v340 = vunpack.c.h.b16 %v78
    %v341 = vunpack.c.l.b16 %v79
    %v342 = vpack.c.b16 %v297, %v294
    %v343 = vpack.c.b16 %v298, %v295
    %v344 = vpack.c.b16 %v299, %v296
    %v345 = vpack.c.b16 %v303, %v300
    %v346 = vpack.c.b16 %v304, %v301
    %v347 = vpack.c.b16 %v305, %v302
    %v348 = vpack.c.b16 %v309, %v306
    %v349 = vpack.c.b16 %v310, %v307
    %v350 = vpack.c.b16 %v311, %v308
    %v351 = vpack.c.b16 %v315, %v312
    %v352 = vpack.c.b16 %v316, %v313
    %v353 = vpack.c.b16 %v317, %v314
    %v354 = vpack.c.b16 %v321, %v318
    %v355 = vpack.c.b16 %v322, %v319
    %v356 = vpack.c.b16 %v323, %v320
    %v357 = vpack.c.b16 %v327, %v324
    %v358 = vpack.c.b16 %v328, %v325
    %v359 = vpack.c.b16 %v329, %v326
    %v360 = vpack.c.b16 %v333, %v330
    %v361 = vpack.c.b16 %v334, %v331
    %v362 = vpack.c.b16 %v335, %v332
    %v363 = vpack.c.b16 %v339, %v336
    %v364 = vpack.c.b16 %v340, %v337
    %v365 = vpack.c.b16 %v341, %v338
    %390 = vmatprep.subr.bf16.mxu0 %v343
    %391 = vmatpush1.bf16.msra.mxu0 %v342
    %392 = vmatprep.subr.bf16.mxu0 %v346
    %393 = vmatpush1.bf16.msra.mxu0 %v345
    %394 = vmatprep.subr.bf16.mxu0 %v349
    %395 = vmatpush1.bf16.msra.mxu0 %v348
    %396 = vmatprep.subr.bf16.mxu0 %v352
    %397 = vmatpush1.bf16.msra.mxu0 %v351
    %398 = vmatprep.subr.bf16.mxu0 %v355
    %399 = vmatpush1.bf16.msra.mxu0 %v354
    %400 = vmatprep.subr.bf16.mxu0 %v358
    %401 = vmatpush1.bf16.msra.mxu0 %v357
    %402 = vmatprep.subr.bf16.mxu0 %v361
    %403 = vmatpush1.bf16.msra.mxu0 %v360
    %404 = vmatprep.subr.bf16.mxu0 %v364
    %405 = vmatpush1.bf16.msra.mxu0 %v363
    %406 = vmatprep.subr.bf16.mxu0 0
    %407 = vmatpush1.bf16.msra.mxu0 0
    %408 = vmatprep.subr.bf16.mxu0 0
    %409 = vmatpush1.bf16.msra.mxu0 0
    %410 = vmatprep.subr.bf16.mxu0 0
    %411 = vmatpush1.bf16.msra.mxu0 0
    %412 = vmatprep.subr.bf16.mxu0 0
    %413 = vmatpush1.bf16.msra.mxu0 0
    %414 = vmatprep.subr.bf16.mxu0 0
    %415 = vmatpush1.bf16.msra.mxu0 0
    %416 = vmatprep.subr.bf16.mxu0 0
    %417 = vmatpush1.bf16.msra.mxu0 0
    %418 = vmatprep.subr.bf16.mxu0 0
    %419 = vmatpush1.bf16.msra.mxu0 0
    %420 = vmatprep.subr.bf16.mxu0 0
    %421 = vmatpush1.bf16.msra.mxu0 0
    %422 = vmatprep.mubr.bf16.mxu0 0
    %423 = vmatmul.mubr.bf16.gmra.mrb[0].mxu0 0
    %v424 = vpop.f32.mrb[0].mxu0
    %v425 = vadd.f32 0.0, %v424
    %v426 = vpop.f32.mrb[0].mxu0
    %v427 = vadd.f32 0.0, %v426
    %v428 = vpop.f32.mrb[0].mxu0
    %v429 = vpop.f32.mrb[0].mxu0
    %430 = vdwg.mxu0
    %431 = vmatprep.subr.bf16.mxu0 0
    %432 = vmatpush1.bf16.msra.mxu0 %v344
    %433 = vmatprep.subr.bf16.mxu0 0
    %434 = vmatpush1.bf16.msra.mxu0 %v347
    %435 = vmatprep.subr.bf16.mxu0 0
    %436 = vmatpush1.bf16.msra.mxu0 %v350
    %437 = vmatprep.subr.bf16.mxu0 0
    %438 = vmatpush1.bf16.msra.mxu0 %v353
    %439 = vmatprep.subr.bf16.mxu0 0
    %440 = vmatpush1.bf16.msra.mxu0 %v356
    %441 = vmatprep.subr.bf16.mxu0 0
    %442 = vmatpush1.bf16.msra.mxu0 %v359
    %443 = vmatprep.subr.bf16.mxu0 0
    %444 = vmatpush1.bf16.msra.mxu0 %v362
    %445 = vmatprep.subr.bf16.mxu0 0
    %446 = vmatpush1.bf16.msra.mxu0 %v365
    %447 = vmatprep.subr.bf16.mxu0 0
    %448 = vmatpush1.bf16.msra.mxu0 0
    %449 = vmatprep.subr.bf16.mxu0 0
    %450 = vmatpush1.bf16.msra.mxu0 0
    %451 = vmatprep.subr.bf16.mxu0 0
    %452 = vmatpush1.bf16.msra.mxu0 0
    %453 = vmatprep.subr.bf16.mxu0 0
    %454 = vmatpush1.bf16.msra.mxu0 0
    %455 = vmatprep.subr.bf16.mxu0 0
    %456 = vmatpush1.bf16.msra.mxu0 0
    %457 = vmatprep.subr.bf16.mxu0 0
    %458 = vmatpush1.bf16.msra.mxu0 0
    %459 = vmatprep.subr.bf16.mxu0 0
    %460 = vmatpush1.bf16.msra.mxu0 0
    %461 = vmatprep.subr.bf16.mxu0 0
    %462 = vmatpush1.bf16.msra.mxu0 0
    %463 = vmatprep.mubr.bf16.mxu0 0
    %464 = vmatmul.mubr.bf16.gmra.mrb[0].mxu0 0
    %v465 = vpop.f32.mrb[0].mxu0
    %v466 = vadd.f32 0.0, %v465
    %v467 = vpop.f32.mrb[0].mxu0
    %v468 = vpop.f32.mrb[0].mxu0
    %v469 = vpop.f32.mrb[0].mxu0
    %470 = vdwg.mxu0
    %v471 = vadd.f32 %v260, %v425
    %v472 = vadd.f32 %v261, %v427
    %v473 = vxor.u32 %v471, 2147483648
    %v474 = vxor.u32 %v472, 2147483648
    %v475 = vmul.f32 %v473, 1.442695
    %v476 = vpow.pop %v475
    %v477 = vmul.f32 %v474, 1.442695
    %v478 = vpow.pop %v477
    %v479 = vadd.f32 %v476, 1.0
    %v480 = vadd.f32 %v478, 1.0
    %v481 = vrcp.pop %v479
    %v482 = vmul.f32 1.0, %v481
    %v483 = vrcp.pop %v480
    %v484 = vmul.f32 1.0, %v483
    %v485 = vlaneseq
    %v486 = vshrl.u32 %v485, 7
    %v487 = vsub.s32 2, %v486
    %v488 = vrot.slane %v80, %v487
    %v490 = vadd.f32 %v466, %v488
    %v491 = vmul.f32 %v482, %v490
    %v492 = vadd.f32 %v246, %v491
    %v493 = vtanh.pop %v492
    %v494 = vsub.f32 0.0, %v493
    %v495 = vmul.f32 %v484, %v494
    %v496 = vadd.f32 %v493, %v495
    %s497 = scvt.s32.f32 %s46
    %v498 = vstv %s497
    %v499 = vmul.f32 %v496, %v498
    %v500 = vmax.f32 %v499, 0.0
    %v501 = vpack.c.bf16 %v499, %v499
    %502 = vmatprep.subr.bf16.mxu0 %v343
    %503 = vmatpush1.bf16.msra.mxu0 %v342
    %504 = vmatprep.subr.bf16.mxu0 %v346
    %505 = vmatpush1.bf16.msra.mxu0 %v345
    %506 = vmatprep.subr.bf16.mxu0 %v349
    %507 = vmatpush1.bf16.msra.mxu0 %v348
    %508 = vmatprep.subr.bf16.mxu0 %v352
    %509 = vmatpush1.bf16.msra.mxu0 %v351
    %510 = vmatprep.subr.bf16.mxu0 %v355
    %511 = vmatpush1.bf16.msra.mxu0 %v354
    %512 = vmatprep.subr.bf16.mxu0 %v358
    %513 = vmatpush1.bf16.msra.mxu0 %v357
    %514 = vmatprep.subr.bf16.mxu0 %v361
    %515 = vmatpush1.bf16.msra.mxu0 %v360
    %516 = vmatprep.subr.bf16.mxu0 %v364
    %517 = vmatpush1.bf16.msra.mxu0 %v363
    %518 = vmatprep.subr.bf16.mxu0 0
    %519 = vmatpush1.bf16.msra.mxu0 0
    %520 = vmatprep.subr.bf16.mxu0 0
    %521 = vmatpush1.bf16.msra.mxu0 0
    %522 = vmatprep.subr.bf16.mxu0 0
    %523 = vmatpush1.bf16.msra.mxu0 0
    %524 = vmatprep.subr.bf16.mxu0 0
    %525 = vmatpush1.bf16.msra.mxu0 0
    %526 = vmatprep.subr.bf16.mxu0 0
    %527 = vmatpush1.bf16.msra.mxu0 0
    %528 = vmatprep.subr.bf16.mxu0 0
    %529 = vmatpush1.bf16.msra.mxu0 0
    %530 = vmatprep.subr.bf16.mxu0 0
    %531 = vmatpush1.bf16.msra.mxu0 0
    %532 = vmatprep.subr.bf16.mxu0 0
    %533 = vmatpush1.bf16.msra.mxu0 0
    %534 = vmatprep.mubr.bf16.mxu0 0
    %535 = vmatmul.mubr.bf16.gmra.mrb[0].mxu0 %v501
    %v536 = vpop.f32.mrb[0].mxu0
    %v537 = vadd.f32 0.0, %v536
    %v538 = vpop.f32.mrb[0].mxu0
    %v539 = vadd.f32 0.0, %v538
    %v540 = vpop.f32.mrb[0].mxu0
    %v541 = vpop.f32.mrb[0].mxu0
    %542 = vdwg.mxu0
    %543 = vmatprep.subr.bf16.mxu0 0
    %544 = vmatpush1.bf16.msra.mxu0 %v344
    %545 = vmatprep.subr.bf16.mxu0 0
    %546 = vmatpush1.bf16.msra.mxu0 %v347
    %547 = vmatprep.subr.bf16.mxu0 0
    %548 = vmatpush1.bf16.msra.mxu0 %v350
    %549 = vmatprep.subr.bf16.mxu0 0
    %550 = vmatpush1.bf16.msra.mxu0 %v353
    %551 = vmatprep.subr.bf16.mxu0 0
    %552 = vmatpush1.bf16.msra.mxu0 %v356
    %553 = vmatprep.subr.bf16.mxu0 0
    %554 = vmatpush1.bf16.msra.mxu0 %v359
    %555 = vmatprep.subr.bf16.mxu0 0
    %556 = vmatpush1.bf16.msra.mxu0 %v362
    %557 = vmatprep.subr.bf16.mxu0 0
    %558 = vmatpush1.bf16.msra.mxu0 %v365
    %559 = vmatprep.subr.bf16.mxu0 0
    %560 = vmatpush1.bf16.msra.mxu0 0
    %561 = vmatprep.subr.bf16.mxu0 0
    %562 = vmatpush1.bf16.msra.mxu0 0
    %563 = vmatprep.subr.bf16.mxu0 0
    %564 = vmatpush1.bf16.msra.mxu0 0
    %565 = vmatprep.subr.bf16.mxu0 0
    %566 = vmatpush1.bf16.msra.mxu0 0
    %567 = vmatprep.subr.bf16.mxu0 0
    %568 = vmatpush1.bf16.msra.mxu0 0
    %569 = vmatprep.subr.bf16.mxu0 0
    %570 = vmatpush1.bf16.msra.mxu0 0
    %571 = vmatprep.subr.bf16.mxu0 0
    %572 = vmatpush1.bf16.msra.mxu0 0
    %573 = vmatprep.subr.bf16.mxu0 0
    %574 = vmatpush1.bf16.msra.mxu0 0
    %575 = vmatprep.mubr.bf16.mxu0 0
    %576 = vmatmul.mubr.bf16.gmra.mrb[0].mxu0 %v501
    %v577 = vpop.f32.mrb[0].mxu0
    %v578 = vadd.f32 0.0, %v577
    %v579 = vpop.f32.mrb[0].mxu0
    %v580 = vpop.f32.mrb[0].mxu0
    %v581 = vpop.f32.mrb[0].mxu0
    %582 = vdwg.mxu0
    %v583 = vadd.f32 %v260, %v537
    %v584 = vadd.f32 %v261, %v539
    %v585 = vxor.u32 %v583, 2147483648
    %v586 = vxor.u32 %v584, 2147483648
    %v587 = vmul.f32 %v585, 1.442695
    %v588 = vpow.pop %v587
    %v589 = vmul.f32 %v586, 1.442695
    %v590 = vpow.pop %v589
    %v591 = vadd.f32 %v588, 1.0
    %v592 = vadd.f32 %v590, 1.0
    %v593 = vrcp.pop %v591
    %v594 = vmul.f32 1.0, %v593
    %v595 = vrcp.pop %v592
    %v596 = vmul.f32 1.0, %v595
    %v597 = vadd.f32 %v578, %v488
    %v598 = vmul.f32 %v594, %v597
    %v599 = vadd.f32 %v246, %v598
    %v600 = vtanh.pop %v599
    %v601 = vsub.f32 %v499, %v600
    %v602 = vmul.f32 %v596, %v601
    %v603 = vadd.f32 %v600, %v602
    %v604 = vmax.f32 %v603, 0.0
    %v605 = vpack.c.bf16 %v603, %v603
    %606 = vmatprep.subr.bf16.mxu0 %v343
    %607 = vmatpush1.bf16.msra.mxu0 %v342
    %608 = vmatprep.subr.bf16.mxu0 %v346
    %609 = vmatpush1.bf16.msra.mxu0 %v345
    %610 = vmatprep.subr.bf16.mxu0 %v349
    %611 = vmatpush1.bf16.msra.mxu0 %v348
    %612 = vmatprep.subr.bf16.mxu0 %v352
    %613 = vmatpush1.bf16.msra.mxu0 %v351
    %614 = vmatprep.subr.bf16.mxu0 %v355
    %615 = vmatpush1.bf16.msra.mxu0 %v354
    %616 = vmatprep.subr.bf16.mxu0 %v358
    %617 = vmatpush1.bf16.msra.mxu0 %v357
    %618 = vmatprep.subr.bf16.mxu0 %v361
    %619 = vmatpush1.bf16.msra.mxu0 %v360
    %620 = vmatprep.subr.bf16.mxu0 %v364
    %621 = vmatpush1.bf16.msra.mxu0 %v363
    %622 = vmatprep.subr.bf16.mxu0 0
    %623 = vmatpush1.bf16.msra.mxu0 0
    %624 = vmatprep.subr.bf16.mxu0 0
    %625 = vmatpush1.bf16.msra.mxu0 0
    %626 = vmatprep.subr.bf16.mxu0 0
    %627 = vmatpush1.bf16.msra.mxu0 0
    %628 = vmatprep.subr.bf16.mxu0 0
    %629 = vmatpush1.bf16.msra.mxu0 0
    %630 = vmatprep.subr.bf16.mxu0 0
    %631 = vmatpush1.bf16.msra.mxu0 0
    %632 = vmatprep.subr.bf16.mxu0 0
    %633 = vmatpush1.bf16.msra.mxu0 0
    %634 = vmatprep.subr.bf16.mxu0 0
    %635 = vmatpush1.bf16.msra.mxu0 0
    %636 = vmatprep.subr.bf16.mxu0 0
    %637 = vmatpush1.bf16.msra.mxu0 0
    %638 = vmatprep.mubr.bf16.mxu0 0
    %639 = vmatmul.mubr.bf16.gmra.mrb[0].mxu0 %v605
    %v640 = vpop.f32.mrb[0].mxu0
    %v641 = vadd.f32 0.0, %v640
    %v642 = vpop.f32.mrb[0].mxu0
    %v643 = vadd.f32 0.0, %v642
    %v644 = vpop.f32.mrb[0].mxu0
    %v645 = vpop.f32.mrb[0].mxu0
    %646 = vdwg.mxu0
    %647 = vmatprep.subr.bf16.mxu0 0
    %648 = vmatpush1.bf16.msra.mxu0 %v344
    %649 = vmatprep.subr.bf16.mxu0 0
    %650 = vmatpush1.bf16.msra.mxu0 %v347
    %651 = vmatprep.subr.bf16.mxu0 0
    %652 = vmatpush1.bf16.msra.mxu0 %v350
    %653 = vmatprep.subr.bf16.mxu0 0
    %654 = vmatpush1.bf16.msra.mxu0 %v353
    %655 = vmatprep.subr.bf16.mxu0 0
    %656 = vmatpush1.bf16.msra.mxu0 %v356
    %657 = vmatprep.subr.bf16.mxu0 0
    %658 = vmatpush1.bf16.msra.mxu0 %v359
    %659 = vmatprep.subr.bf16.mxu0 0
    %660 = vmatpush1.bf16.msra.mxu0 %v362
    %661 = vmatprep.subr.bf16.mxu0 0
    %662 = vmatpush1.bf16.msra.mxu0 %v365
    %663 = vmatprep.subr.bf16.mxu0 0
    %664 = vmatpush1.bf16.msra.mxu0 0
    %665 = vmatprep.subr.bf16.mxu0 0
    %666 = vmatpush1.bf16.msra.mxu0 0
    %667 = vmatprep.subr.bf16.mxu0 0
    %668 = vmatpush1.bf16.msra.mxu0 0
    %669 = vmatprep.subr.bf16.mxu0 0
    %670 = vmatpush1.bf16.msra.mxu0 0
    %671 = vmatprep.subr.bf16.mxu0 0
    %672 = vmatpush1.bf16.msra.mxu0 0
    %673 = vmatprep.subr.bf16.mxu0 0
    %674 = vmatpush1.bf16.msra.mxu0 0
    %675 = vmatprep.subr.bf16.mxu0 0
    %676 = vmatpush1.bf16.msra.mxu0 0
    %677 = vmatprep.subr.bf16.mxu0 0
    %678 = vmatpush1.bf16.msra.mxu0 0
    %679 = vmatprep.mubr.bf16.mxu0 0
    %680 = vmatmul.mubr.bf16.gmra.mrb[0].mxu0 %v605
    %v681 = vpop.f32.mrb[0].mxu0
    %v682 = vadd.f32 0.0, %v681
    %v683 = vpop.f32.mrb[0].mxu0
    %v684 = vpop.f32.mrb[0].mxu0
    %v685 = vpop.f32.mrb[0].mxu0
    %686 = vdwg.mxu0
    %v687 = vadd.f32 %v260, %v641
    %v688 = vadd.f32 %v261, %v643
    %v689 = vxor.u32 %v687, 2147483648
    %v690 = vxor.u32 %v688, 2147483648
    %v691 = vmul.f32 %v689, 1.442695
    %v692 = vpow.pop %v691
    %v693 = vmul.f32 %v690, 1.442695
    %v694 = vpow.pop %v693
    %v695 = vadd.f32 %v692, 1.0
    %v696 = vadd.f32 %v694, 1.0
    %v697 = vrcp.pop %v695
    %v698 = vmul.f32 1.0, %v697
    %v699 = vrcp.pop %v696
    %v700 = vmul.f32 1.0, %v699
    %v701 = vadd.f32 %v682, %v488
    %v702 = vmul.f32 %v698, %v701
    %v703 = vadd.f32 %v246, %v702
    %v704 = vtanh.pop %v703
    %v705 = vsub.f32 %v603, %v704
    %v706 = vmul.f32 %v700, %v705
    %v707 = vadd.f32 %v704, %v706
    %v708 = vmax.f32 %v707, 0.0
    %v709 = vpack.c.bf16 %v707, %v707
    %710 = vmatprep.subr.bf16.mxu0 %v343
    %711 = vmatpush1.bf16.msra.mxu0 %v342
    %712 = vmatprep.subr.bf16.mxu0 %v346
    %713 = vmatpush1.bf16.msra.mxu0 %v345
    %714 = vmatprep.subr.bf16.mxu0 %v349
    %715 = vmatpush1.bf16.msra.mxu0 %v348
    %716 = vmatprep.subr.bf16.mxu0 %v352
    %717 = vmatpush1.bf16.msra.mxu0 %v351
    %718 = vmatprep.subr.bf16.mxu0 %v355
    %719 = vmatpush1.bf16.msra.mxu0 %v354
    %720 = vmatprep.subr.bf16.mxu0 %v358
    %721 = vmatpush1.bf16.msra.mxu0 %v357
    %722 = vmatprep.subr.bf16.mxu0 %v361
    %723 = vmatpush1.bf16.msra.mxu0 %v360
    %724 = vmatprep.subr.bf16.mxu0 %v364
    %725 = vmatpush1.bf16.msra.mxu0 %v363
    %726 = vmatprep.subr.bf16.mxu0 0
    %727 = vmatpush1.bf16.msra.mxu0 0
    %728 = vmatprep.subr.bf16.mxu0 0
    %729 = vmatpush1.bf16.msra.mxu0 0
    %730 = vmatprep.subr.bf16.mxu0 0
    %731 = vmatpush1.bf16.msra.mxu0 0
    %732 = vmatprep.subr.bf16.mxu0 0
    %733 = vmatpush1.bf16.msra.mxu0 0
    %734 = vmatprep.subr.bf16.mxu0 0
    %735 = vmatpush1.bf16.msra.mxu0 0
    %736 = vmatprep.subr.bf16.mxu0 0
    %737 = vmatpush1.bf16.msra.mxu0 0
    %738 = vmatprep.subr.bf16.mxu0 0
    %739 = vmatpush1.bf16.msra.mxu0 0
    %740 = vmatprep.subr.bf16.mxu0 0
    %741 = vmatpush1.bf16.msra.mxu0 0
    %742 = vmatprep.mubr.bf16.mxu0 0
    %743 = vmatmul.mubr.bf16.gmra.mrb[0].mxu0 %v709
    %v744 = vpop.f32.mrb[0].mxu0
    %v745 = vadd.f32 0.0, %v744
    %v746 = vpop.f32.mrb[0].mxu0
    %v747 = vadd.f32 0.0, %v746
    %v748 = vpop.f32.mrb[0].mxu0
    %v749 = vpop.f32.mrb[0].mxu0
    %750 = vdwg.mxu0
    %751 = vmatprep.subr.bf16.mxu0 0
    %752 = vmatpush1.bf16.msra.mxu0 %v344
    %753 = vmatprep.subr.bf16.mxu0 0
    %754 = vmatpush1.bf16.msra.mxu0 %v347
    %755 = vmatprep.subr.bf16.mxu0 0
    %756 = vmatpush1.bf16.msra.mxu0 %v350
    %757 = vmatprep.subr.bf16.mxu0 0
    %758 = vmatpush1.bf16.msra.mxu0 %v353
    %759 = vmatprep.subr.bf16.mxu0 0
    %760 = vmatpush1.bf16.msra.mxu0 %v356
    %761 = vmatprep.subr.bf16.mxu0 0
    %762 = vmatpush1.bf16.msra.mxu0 %v359
    %763 = vmatprep.subr.bf16.mxu0 0
    %764 = vmatpush1.bf16.msra.mxu0 %v362
    %765 = vmatprep.subr.bf16.mxu0 0
    %766 = vmatpush1.bf16.msra.mxu0 %v365
    %767 = vmatprep.subr.bf16.mxu0 0
    %768 = vmatpush1.bf16.msra.mxu0 0
    %769 = vmatprep.subr.bf16.mxu0 0
    %770 = vmatpush1.bf16.msra.mxu0 0
    %771 = vmatprep.subr.bf16.mxu0 0
    %772 = vmatpush1.bf16.msra.mxu0 0
    %773 = vmatprep.subr.bf16.mxu0 0
    %774 = vmatpush1.bf16.msra.mxu0 0
    %775 = vmatprep.subr.bf16.mxu0 0
    %776 = vmatpush1.bf16.msra.mxu0 0
    %777 = vmatprep.subr.bf16.mxu0 0
    %778 = vmatpush1.bf16.msra.mxu0 0
    %779 = vmatprep.subr.bf16.mxu0 0
    %780 = vmatpush1.bf16.msra.mxu0 0
    %781 = vmatprep.subr.bf16.mxu0 0
    %782 = vmatpush1.bf16.msra.mxu0 0
    %783 = vmatprep.mubr.bf16.mxu0 0
    %784 = vmatmul.mubr.bf16.gmra.mrb[0].mxu0 %v709
    %v785 = vpop.f32.mrb[0].mxu0
    %v786 = vadd.f32 0.0, %v785
    %v787 = vpop.f32.mrb[0].mxu0
    %v788 = vpop.f32.mrb[0].mxu0
    %v789 = vpop.f32.mrb[0].mxu0
    %790 = vdwg.mxu0
    %v791 = vadd.f32 %v260, %v745
    %v792 = vadd.f32 %v261, %v747
    %v793 = vxor.u32 %v791, 2147483648
    %v794 = vxor.u32 %v792, 2147483648
    %v795 = vmul.f32 %v793, 1.442695
    %v796 = vpow.pop %v795
    %v797 = vmul.f32 %v794, 1.442695
    %v798 = vpow.pop %v797
    %v799 = vadd.f32 %v796, 1.0
    %v800 = vadd.f32 %v798, 1.0
    %v801 = vrcp.pop %v799
    %v802 = vmul.f32 1.0, %v801
    %v803 = vrcp.pop %v800
    %v804 = vmul.f32 1.0, %v803
    %v805 = vadd.f32 %v786, %v488
    %v806 = vmul.f32 %v802, %v805
    %v807 = vadd.f32 %v246, %v806
    %v808 = vtanh.pop %v807
    %v809 = vsub.f32 %v707, %v808
    %v810 = vmul.f32 %v804, %v809
    %v811 = vadd.f32 %v808, %v810
    %v812 = vmax.f32 %v811, 0.0
    %v813 = vpack.c.bf16 %v811, %v811
    %814 = vmatprep.subr.bf16.mxu0 %v343
    %815 = vmatpush1.bf16.msra.mxu0 %v342
    %816 = vmatprep.subr.bf16.mxu0 %v346
    %817 = vmatpush1.bf16.msra.mxu0 %v345
    %818 = vmatprep.subr.bf16.mxu0 %v349
    %819 = vmatpush1.bf16.msra.mxu0 %v348
    %820 = vmatprep.subr.bf16.mxu0 %v352
    %821 = vmatpush1.bf16.msra.mxu0 %v351
    %822 = vmatprep.subr.bf16.mxu0 %v355
    %823 = vmatpush1.bf16.msra.mxu0 %v354
    %824 = vmatprep.subr.bf16.mxu0 %v358
    %825 = vmatpush1.bf16.msra.mxu0 %v357
    %826 = vmatprep.subr.bf16.mxu0 %v361
    %827 = vmatpush1.bf16.msra.mxu0 %v360
    %828 = vmatprep.subr.bf16.mxu0 %v364
    %829 = vmatpush1.bf16.msra.mxu0 %v363
    %830 = vmatprep.subr.bf16.mxu0 0
    %831 = vmatpush1.bf16.msra.mxu0 0
    %832 = vmatprep.subr.bf16.mxu0 0
    %833 = vmatpush1.bf16.msra.mxu0 0
    %834 = vmatprep.subr.bf16.mxu0 0
    %835 = vmatpush1.bf16.msra.mxu0 0
    %836 = vmatprep.subr.bf16.mxu0 0
    %837 = vmatpush1.bf16.msra.mxu0 0
    %838 = vmatprep.subr.bf16.mxu0 0
    %839 = vmatpush1.bf16.msra.mxu0 0
    %840 = vmatprep.subr.bf16.mxu0 0
    %841 = vmatpush1.bf16.msra.mxu0 0
    %842 = vmatprep.subr.bf16.mxu0 0
    %843 = vmatpush1.bf16.msra.mxu0 0
    %844 = vmatprep.subr.bf16.mxu0 0
    %845 = vmatpush1.bf16.msra.mxu0 0
    %846 = vmatprep.mubr.bf16.mxu0 0
    %847 = vmatmul.mubr.bf16.gmra.mrb[0].mxu0 %v813
    %v848 = vpop.f32.mrb[0].mxu0
    %v849 = vadd.f32 0.0, %v848
    %v850 = vpop.f32.mrb[0].mxu0
    %v851 = vadd.f32 0.0, %v850
    %v852 = vpop.f32.mrb[0].mxu0
    %v853 = vpop.f32.mrb[0].mxu0
    %854 = vdwg.mxu0
    %855 = vmatprep.subr.bf16.mxu0 0
    %856 = vmatpush1.bf16.msra.mxu0 %v344
    %857 = vmatprep.subr.bf16.mxu0 0
    %858 = vmatpush1.bf16.msra.mxu0 %v347
    %859 = vmatprep.subr.bf16.mxu0 0
    %860 = vmatpush1.bf16.msra.mxu0 %v350
    %861 = vmatprep.subr.bf16.mxu0 0
    %862 = vmatpush1.bf16.msra.mxu0 %v353
    %863 = vmatprep.subr.bf16.mxu0 0
    %864 = vmatpush1.bf16.msra.mxu0 %v356
    %865 = vmatprep.subr.bf16.mxu0 0
    %866 = vmatpush1.bf16.msra.mxu0 %v359
    %867 = vmatprep.subr.bf16.mxu0 0
    %868 = vmatpush1.bf16.msra.mxu0 %v362
    %869 = vmatprep.subr.bf16.mxu0 0
    %870 = vmatpush1.bf16.msra.mxu0 %v365
    %871 = vmatprep.subr.bf16.mxu0 0
    %872 = vmatpush1.bf16.msra.mxu0 0
    %873 = vmatprep.subr.bf16.mxu0 0
    %874 = vmatpush1.bf16.msra.mxu0 0
    %875 = vmatprep.subr.bf16.mxu0 0
    %876 = vmatpush1.bf16.msra.mxu0 0
    %877 = vmatprep.subr.bf16.mxu0 0
    %878 = vmatpush1.bf16.msra.mxu0 0
    %879 = vmatprep.subr.bf16.mxu0 0
    %880 = vmatpush1.bf16.msra.mxu0 0
    %881 = vmatprep.subr.bf16.mxu0 0
    %882 = vmatpush1.bf16.msra.mxu0 0
    %883 = vmatprep.subr.bf16.mxu0 0
    %884 = vmatpush1.bf16.msra.mxu0 0
    %885 = vmatprep.subr.bf16.mxu0 0
    %886 = vmatpush1.bf16.msra.mxu0 0
    %887 = vmatprep.mubr.bf16.mxu0 0
    %888 = vmatmul.mubr.bf16.gmra.mrb[0].mxu0 %v813
    %v889 = vpop.f32.mrb[0].mxu0
    %v890 = vadd.f32 0.0, %v889
    %v891 = vpop.f32.mrb[0].mxu0
    %v892 = vpop.f32.mrb[0].mxu0
    %v893 = vpop.f32.mrb[0].mxu0
    %894 = vdwg.mxu0
    %v895 = vadd.f32 %v260, %v849
    %v896 = vadd.f32 %v261, %v851
    %v897 = vxor.u32 %v895, 2147483648
    %v898 = vxor.u32 %v896, 2147483648
    %v899 = vmul.f32 %v897, 1.442695
    %v900 = vpow.pop %v899
    %v901 = vmul.f32 %v898, 1.442695
    %v902 = vpow.pop %v901
    %v903 = vadd.f32 %v900, 1.0
    %v904 = vadd.f32 %v902, 1.0
    %v905 = vrcp.pop %v903
    %v906 = vmul.f32 1.0, %v905
    %v907 = vrcp.pop %v904
    %v908 = vmul.f32 1.0, %v907
    %v909 = vadd.f32 %v890, %v488
    %v910 = vmul.f32 %v906, %v909
    %v911 = vadd.f32 %v246, %v910
    %v912 = vtanh.pop %v911
    %v913 = vsub.f32 %v811, %v912
    %v914 = vmul.f32 %v908, %v913
    %v915 = vadd.f32 %v912, %v914
    %v916 = vmax.f32 %v915, 0.0
    %v917 = vpack.c.bf16 %v915, %v915
    %918 = vmatprep.subr.bf16.mxu0 %v343
    %919 = vmatpush1.bf16.msra.mxu0 %v342
    %920 = vmatprep.subr.bf16.mxu0 %v346
    %921 = vmatpush1.bf16.msra.mxu0 %v345
    %922 = vmatprep.subr.bf16.mxu0 %v349
    %923 = vmatpush1.bf16.msra.mxu0 %v348
    %924 = vmatprep.subr.bf16.mxu0 %v352
    %925 = vmatpush1.bf16.msra.mxu0 %v351
    %926 = vmatprep.subr.bf16.mxu0 %v355
    %927 = vmatpush1.bf16.msra.mxu0 %v354
    %928 = vmatprep.subr.bf16.mxu0 %v358
    %929 = vmatpush1.bf16.msra.mxu0 %v357
    %930 = vmatprep.subr.bf16.mxu0 %v361
    %931 = vmatpush1.bf16.msra.mxu0 %v360
    %932 = vmatprep.subr.bf16.mxu0 %v364
    %933 = vmatpush1.bf16.msra.mxu0 %v363
    %934 = vmatprep.subr.bf16.mxu0 0
    %935 = vmatpush1.bf16.msra.mxu0 0
    %936 = vmatprep.subr.bf16.mxu0 0
    %937 = vmatpush1.bf16.msra.mxu0 0
    %938 = vmatprep.subr.bf16.mxu0 0
    %939 = vmatpush1.bf16.msra.mxu0 0
    %940 = vmatprep.subr.bf16.mxu0 0
    %941 = vmatpush1.bf16.msra.mxu0 0
    %942 = vmatprep.subr.bf16.mxu0 0
    %943 = vmatpush1.bf16.msra.mxu0 0
    %944 = vmatprep.subr.bf16.mxu0 0
    %945 = vmatpush1.bf16.msra.mxu0 0
    %946 = vmatprep.subr.bf16.mxu0 0
    %947 = vmatpush1.bf16.msra.mxu0 0
    %948 = vmatprep.subr.bf16.mxu0 0
    %949 = vmatpush1.bf16.msra.mxu0 0
    %950 = vmatprep.mubr.bf16.mxu0 0
    %951 = vmatmul.mubr.bf16.gmra.mrb[0].mxu0 %v917
    %v952 = vpop.f32.mrb[0].mxu0
    %v953 = vadd.f32 0.0, %v952
    %v954 = vpop.f32.mrb[0].mxu0
    %v955 = vadd.f32 0.0, %v954
    %v956 = vpop.f32.mrb[0].mxu0
    %v957 = vpop.f32.mrb[0].mxu0
    %958 = vdwg.mxu0
    %959 = vmatprep.subr.bf16.mxu0 0
    %960 = vmatpush1.bf16.msra.mxu0 %v344
    %961 = vmatprep.subr.bf16.mxu0 0
    %962 = vmatpush1.bf16.msra.mxu0 %v347
    %963 = vmatprep.subr.bf16.mxu0 0
    %964 = vmatpush1.bf16.msra.mxu0 %v350
    %965 = vmatprep.subr.bf16.mxu0 0
    %966 = vmatpush1.bf16.msra.mxu0 %v353
    %967 = vmatprep.subr.bf16.mxu0 0
    %968 = vmatpush1.bf16.msra.mxu0 %v356
    %969 = vmatprep.subr.bf16.mxu0 0
    %970 = vmatpush1.bf16.msra.mxu0 %v359
    %971 = vmatprep.subr.bf16.mxu0 0
    %972 = vmatpush1.bf16.msra.mxu0 %v362
    %973 = vmatprep.subr.bf16.mxu0 0
    %974 = vmatpush1.bf16.msra.mxu0 %v365
    %975 = vmatprep.subr.bf16.mxu0 0
    %976 = vmatpush1.bf16.msra.mxu0 0
    %977 = vmatprep.subr.bf16.mxu0 0
    %978 = vmatpush1.bf16.msra.mxu0 0
    %979 = vmatprep.subr.bf16.mxu0 0
    %980 = vmatpush1.bf16.msra.mxu0 0
    %981 = vmatprep.subr.bf16.mxu0 0
    %982 = vmatpush1.bf16.msra.mxu0 0
    %983 = vmatprep.subr.bf16.mxu0 0
    %984 = vmatpush1.bf16.msra.mxu0 0
    %985 = vmatprep.subr.bf16.mxu0 0
    %986 = vmatpush1.bf16.msra.mxu0 0
    %987 = vmatprep.subr.bf16.mxu0 0
    %988 = vmatpush1.bf16.msra.mxu0 0
    %989 = vmatprep.subr.bf16.mxu0 0
    %990 = vmatpush1.bf16.msra.mxu0 0
    %991 = vmatprep.mubr.bf16.mxu0 0
    %992 = vmatmul.mubr.bf16.gmra.mrb[0].mxu0 %v917
    %v993 = vpop.f32.mrb[0].mxu0
    %v994 = vadd.f32 0.0, %v993
    %v995 = vpop.f32.mrb[0].mxu0
    %v996 = vpop.f32.mrb[0].mxu0
    %v997 = vpop.f32.mrb[0].mxu0
    %998 = vdwg.mxu0
    %v999 = vadd.f32 %v260, %v953
    %v1000 = vadd.f32 %v261, %v955
    %v1001 = vxor.u32 %v999, 2147483648
    %v1002 = vxor.u32 %v1000, 2147483648
    %v1003 = vmul.f32 %v1001, 1.442695
    %v1004 = vpow.pop %v1003
    %v1005 = vmul.f32 %v1002, 1.442695
    %v1006 = vpow.pop %v1005
    %v1007 = vadd.f32 %v1004, 1.0
    %v1008 = vadd.f32 %v1006, 1.0
    %v1009 = vrcp.pop %v1007
    %v1010 = vmul.f32 1.0, %v1009
    %v1011 = vrcp.pop %v1008
    %v1012 = vmul.f32 1.0, %v1011
    %v1013 = vadd.f32 %v994, %v488
    %v1014 = vmul.f32 %v1010, %v1013
    %v1015 = vadd.f32 %v246, %v1014
    %v1016 = vtanh.pop %v1015
    %v1017 = vsub.f32 %v915, %v1016
    %v1018 = vmul.f32 %v1012, %v1017
    %v1019 = vadd.f32 %v1016, %v1018
    %v1020 = vmax.f32 %v1019, 0.0
    %v1021 = vpack.c.bf16 %v1019, %v1019
    %1022 = vmatprep.subr.bf16.mxu0 %v343
    %1023 = vmatpush1.bf16.msra.mxu0 %v342
    %1024 = vmatprep.subr.bf16.mxu0 %v346
    %1025 = vmatpush1.bf16.msra.mxu0 %v345
    %1026 = vmatprep.subr.bf16.mxu0 %v349
    %1027 = vmatpush1.bf16.msra.mxu0 %v348
    %1028 = vmatprep.subr.bf16.mxu0 %v352
    %1029 = vmatpush1.bf16.msra.mxu0 %v351
    %1030 = vmatprep.subr.bf16.mxu0 %v355
    %1031 = vmatpush1.bf16.msra.mxu0 %v354
    %1032 = vmatprep.subr.bf16.mxu0 %v358
    %1033 = vmatpush1.bf16.msra.mxu0 %v357
    %1034 = vmatprep.subr.bf16.mxu0 %v361
    %1035 = vmatpush1.bf16.msra.mxu0 %v360
    %1036 = vmatprep.subr.bf16.mxu0 %v364
    %1037 = vmatpush1.bf16.msra.mxu0 %v363
    %1038 = vmatprep.subr.bf16.mxu0 0
    %1039 = vmatpush1.bf16.msra.mxu0 0
    %1040 = vmatprep.subr.bf16.mxu0 0
    %1041 = vmatpush1.bf16.msra.mxu0 0
    %1042 = vmatprep.subr.bf16.mxu0 0
    %1043 = vmatpush1.bf16.msra.mxu0 0
    %1044 = vmatprep.subr.bf16.mxu0 0
    %1045 = vmatpush1.bf16.msra.mxu0 0
    %1046 = vmatprep.subr.bf16.mxu0 0
    %1047 = vmatpush1.bf16.msra.mxu0 0
    %1048 = vmatprep.subr.bf16.mxu0 0
    %1049 = vmatpush1.bf16.msra.mxu0 0
    %1050 = vmatprep.subr.bf16.mxu0 0
    %1051 = vmatpush1.bf16.msra.mxu0 0
    %1052 = vmatprep.subr.bf16.mxu0 0
    %1053 = vmatpush1.bf16.msra.mxu0 0
    %1054 = vmatprep.mubr.bf16.mxu0 0
    %1055 = vmatmul.mubr.bf16.gmra.mrb[0].mxu0 %v1021
    %v1056 = vpop.f32.mrb[0].mxu0
    %v1057 = vadd.f32 0.0, %v1056
    %v1058 = vpop.f32.mrb[0].mxu0
    %v1059 = vadd.f32 0.0, %v1058
    %v1060 = vpop.f32.mrb[0].mxu0
    %v1061 = vpop.f32.mrb[0].mxu0
    %1062 = vdwg.mxu0
    %1063 = vmatprep.subr.bf16.mxu0 0
    %1064 = vmatpush1.bf16.msra.mxu0 %v344
    %1065 = vmatprep.subr.bf16.mxu0 0
    %1066 = vmatpush1.bf16.msra.mxu0 %v347
    %1067 = vmatprep.subr.bf16.mxu0 0
    %1068 = vmatpush1.bf16.msra.mxu0 %v350
    %1069 = vmatprep.subr.bf16.mxu0 0
    %1070 = vmatpush1.bf16.msra.mxu0 %v353
    %1071 = vmatprep.subr.bf16.mxu0 0
    %1072 = vmatpush1.bf16.msra.mxu0 %v356
    %1073 = vmatprep.subr.bf16.mxu0 0
    %1074 = vmatpush1.bf16.msra.mxu0 %v359
    %1075 = vmatprep.subr.bf16.mxu0 0
    %1076 = vmatpush1.bf16.msra.mxu0 %v362
    %1077 = vmatprep.subr.bf16.mxu0 0
    %1078 = vmatpush1.bf16.msra.mxu0 %v365
    %1079 = vmatprep.subr.bf16.mxu0 0
    %1080 = vmatpush1.bf16.msra.mxu0 0
    %1081 = vmatprep.subr.bf16.mxu0 0
    %1082 = vmatpush1.bf16.msra.mxu0 0
    %1083 = vmatprep.subr.bf16.mxu0 0
    %1084 = vmatpush1.bf16.msra.mxu0 0
    %1085 = vmatprep.subr.bf16.mxu0 0
    %1086 = vmatpush1.bf16.msra.mxu0 0
    %1087 = vmatprep.subr.bf16.mxu0 0
    %1088 = vmatpush1.bf16.msra.mxu0 0
    %1089 = vmatprep.subr.bf16.mxu0 0
    %1090 = vmatpush1.bf16.msra.mxu0 0
    %1091 = vmatprep.subr.bf16.mxu0 0
    %1092 = vmatpush1.bf16.msra.mxu0 0
    %1093 = vmatprep.subr.bf16.mxu0 0
    %1094 = vmatpush1.bf16.msra.mxu0 0
    %1095 = vmatprep.mubr.bf16.mxu0 0
    %1096 = vmatmul.mubr.bf16.gmra.mrb[0].mxu0 %v1021
    %v1097 = vpop.f32.mrb[0].mxu0
    %v1098 = vadd.f32 0.0, %v1097
    %v1099 = vpop.f32.mrb[0].mxu0
    %v1100 = vpop.f32.mrb[0].mxu0
    %v1101 = vpop.f32.mrb[0].mxu0
    %1102 = vdwg.mxu0
    %v1103 = vadd.f32 %v260, %v1057
    %v1104 = vadd.f32 %v261, %v1059
    %v1105 = vxor.u32 %v1103, 2147483648
    %v1106 = vxor.u32 %v1104, 2147483648
    %v1107 = vmul.f32 %v1105, 1.442695
    %v1108 = vpow.pop %v1107
    %v1109 = vmul.f32 %v1106, 1.442695
    %v1110 = vpow.pop %v1109
    %v1111 = vadd.f32 %v1108, 1.0
    %v1112 = vadd.f32 %v1110, 1.0
    %v1113 = vrcp.pop %v1111
    %v1114 = vmul.f32 1.0, %v1113
    %v1115 = vrcp.pop %v1112
    %v1116 = vmul.f32 1.0, %v1115
    %v1117 = vadd.f32 %v1098, %v488
    %v1118 = vmul.f32 %v1114, %v1117
    %v1119 = vadd.f32 %v246, %v1118
    %v1120 = vtanh.pop %v1119
    %v1121 = vsub.f32 %v1019, %v1120
    %v1122 = vmul.f32 %v1116, %v1121
    %v1123 = vadd.f32 %v1120, %v1122
    %v1124 = vmax.f32 %v1123, 0.0
    %v1125 = vpack.c.bf16 %v1123, %v1123
    %1126 = vmatprep.subr.bf16.mxu0 %v343
    %1127 = vmatpush1.bf16.msra.mxu0 %v342
    %1128 = vmatprep.subr.bf16.mxu0 %v346
    %1129 = vmatpush1.bf16.msra.mxu0 %v345
    %1130 = vmatprep.subr.bf16.mxu0 %v349
    %1131 = vmatpush1.bf16.msra.mxu0 %v348
    %1132 = vmatprep.subr.bf16.mxu0 %v352
    %1133 = vmatpush1.bf16.msra.mxu0 %v351
    %1134 = vmatprep.subr.bf16.mxu0 %v355
    %1135 = vmatpush1.bf16.msra.mxu0 %v354
    %1136 = vmatprep.subr.bf16.mxu0 %v358
    %1137 = vmatpush1.bf16.msra.mxu0 %v357
    %1138 = vmatprep.subr.bf16.mxu0 %v361
    %1139 = vmatpush1.bf16.msra.mxu0 %v360
    %1140 = vmatprep.subr.bf16.mxu0 %v364
    %1141 = vmatpush1.bf16.msra.mxu0 %v363
    %1142 = vmatprep.subr.bf16.mxu0 0
    %1143 = vmatpush1.bf16.msra.mxu0 0
    %1144 = vmatprep.subr.bf16.mxu0 0
    %1145 = vmatpush1.bf16.msra.mxu0 0
    %1146 = vmatprep.subr.bf16.mxu0 0
    %1147 = vmatpush1.bf16.msra.mxu0 0
    %1148 = vmatprep.subr.bf16.mxu0 0
    %1149 = vmatpush1.bf16.msra.mxu0 0
    %1150 = vmatprep.subr.bf16.mxu0 0
    %1151 = vmatpush1.bf16.msra.mxu0 0
    %1152 = vmatprep.subr.bf16.mxu0 0
    %1153 = vmatpush1.bf16.msra.mxu0 0
    %1154 = vmatprep.subr.bf16.mxu0 0
    %1155 = vmatpush1.bf16.msra.mxu0 0
    %1156 = vmatprep.subr.bf16.mxu0 0
    %1157 = vmatpush1.bf16.msra.mxu0 0
    %1158 = vmatprep.mubr.bf16.mxu0 0
    %1159 = vmatmul.mubr.bf16.gmra.mrb[0].mxu0 %v1125
    %v1160 = vpop.f32.mrb[0].mxu0
    %v1161 = vadd.f32 0.0, %v1160
    %v1162 = vpop.f32.mrb[0].mxu0
    %v1163 = vadd.f32 0.0, %v1162
    %v1164 = vpop.f32.mrb[0].mxu0
    %v1165 = vpop.f32.mrb[0].mxu0
    %1166 = vdwg.mxu0
    %1167 = vmatprep.subr.bf16.mxu0 0
    %1168 = vmatpush1.bf16.msra.mxu0 %v344
    %1169 = vmatprep.subr.bf16.mxu0 0
    %1170 = vmatpush1.bf16.msra.mxu0 %v347
    %1171 = vmatprep.subr.bf16.mxu0 0
    %1172 = vmatpush1.bf16.msra.mxu0 %v350
    %1173 = vmatprep.subr.bf16.mxu0 0
    %1174 = vmatpush1.bf16.msra.mxu0 %v353
    %1175 = vmatprep.subr.bf16.mxu0 0
    %1176 = vmatpush1.bf16.msra.mxu0 %v356
    %1177 = vmatprep.subr.bf16.mxu0 0
    %1178 = vmatpush1.bf16.msra.mxu0 %v359
    %1179 = vmatprep.subr.bf16.mxu0 0
    %1180 = vmatpush1.bf16.msra.mxu0 %v362
    %1181 = vmatprep.subr.bf16.mxu0 0
    %1182 = vmatpush1.bf16.msra.mxu0 %v365
    %1183 = vmatprep.subr.bf16.mxu0 0
    %1184 = vmatpush1.bf16.msra.mxu0 0
    %1185 = vmatprep.subr.bf16.mxu0 0
    %1186 = vmatpush1.bf16.msra.mxu0 0
    %1187 = vmatprep.subr.bf16.mxu0 0
    %1188 = vmatpush1.bf16.msra.mxu0 0
    %1189 = vmatprep.subr.bf16.mxu0 0
    %1190 = vmatpush1.bf16.msra.mxu0 0
    %1191 = vmatprep.subr.bf16.mxu0 0
    %1192 = vmatpush1.bf16.msra.mxu0 0
    %1193 = vmatprep.subr.bf16.mxu0 0
    %1194 = vmatpush1.bf16.msra.mxu0 0
    %1195 = vmatprep.subr.bf16.mxu0 0
    %1196 = vmatpush1.bf16.msra.mxu0 0
    %1197 = vmatprep.subr.bf16.mxu0 0
    %1198 = vmatpush1.bf16.msra.mxu0 0
    %1199 = vmatprep.mubr.bf16.mxu0 0
    %1200 = vmatmul.mubr.bf16.gmra.mrb[0].mxu0 %v1125
    %v1201 = vpop.f32.mrb[0].mxu0
    %v1202 = vadd.f32 0.0, %v1201
    %v1203 = vpop.f32.mrb[0].mxu0
    %v1204 = vpop.f32.mrb[0].mxu0
    %v1205 = vpop.f32.mrb[0].mxu0
    %1206 = vdwg.mxu0
    %v1207 = vadd.f32 %v260, %v1161
    %v1208 = vadd.f32 %v261, %v1163
    %v1209 = vxor.u32 %v1207, 2147483648
    %v1210 = vxor.u32 %v1208, 2147483648
    %v1211 = vmul.f32 %v1209, 1.442695
    %v1212 = vpow.pop %v1211
    %v1213 = vmul.f32 %v1210, 1.442695
    %v1214 = vpow.pop %v1213
    %v1215 = vadd.f32 %v1212, 1.0
    %v1216 = vadd.f32 %v1214, 1.0
    %v1217 = vrcp.pop %v1215
    %v1218 = vmul.f32 1.0, %v1217
    %v1219 = vrcp.pop %v1216
    %v1220 = vmul.f32 1.0, %v1219
    %v1221 = vadd.f32 %v1202, %v488
    %v1222 = vmul.f32 %v1218, %v1221
    %v1223 = vadd.f32 %v246, %v1222
    %v1224 = vtanh.pop %v1223
    %v1225 = vsub.f32 %v1123, %v1224
    %v1226 = vmul.f32 %v1220, %v1225
    %v1227 = vadd.f32 %v1224, %v1226
    %v1228 = vmax.f32 %v1227, 0.0
    %v1230 = vrot.slane %v604, 7
    %v1233 = vrot.slane %v708, 6
    %v1236 = vrot.slane %v812, 5
    %v1239 = vrot.slane %v916, 4
    %v1242 = vrot.slane %v1020, 3
    %v1245 = vrot.slane %v1124, 2
    %v1248 = vrot.slane %v1228, 1
    %vm1250 = vcmask 1040384
    %v1251 = vsel %vm1250, %v500, %v1230
    %vm1252 = vcmask 1041408
    %v1253 = vsel %vm1252, %v1251, %v1233
    %vm1254 = vcmask 1042432
    %v1255 = vsel %vm1254, %v1253, %v1236
    %vm1256 = vcmask 1043456
    %v1257 = vsel %vm1256, %v1255, %v1239
    %vm1258 = vcmask 1044480
    %v1259 = vsel %vm1258, %v1257, %v1242
    %vm1260 = vcmask 1045504
    %v1261 = vsel %vm1260, %v1259, %v1245
    %vm1262 = vcmask 1046528
    %v1263 = vsel %vm1262, %v1261, %v1248
    %v1264 = vpack.c.bf16 %v1263, %v1263
    %v1265 = vld [vmem:[%s6] sm:$0xf]
    %v1266 = vld [vmem:[%s6 + $0x4] sm:$0xf]
    %v1267 = vld [vmem:[%s6 + $0x8] sm:$0xf]
    %v1268 = vld [vmem:[%s6 + $0xc] sm:$0xf]
    %v1269 = vld [vmem:[%s6 + $0x10] sm:$0xf]
    %v1270 = vld [vmem:[%s6 + $0x14] sm:$0xf]
    %v1271 = vld [vmem:[%s6 + $0x18] sm:$0xf]
    %v1272 = vld [vmem:[%s6 + $0x1c] sm:$0xf]
    %v1273 = vld [vmem:[%s6 + $0x20] sm:$0xf]
    %v1274 = vld [vmem:[%s6 + $0x24] sm:$0xf]
    %v1275 = vld [vmem:[%s6 + $0x28] sm:$0xf]
    %v1276 = vld [vmem:[%s6 + $0x2c] sm:$0xf]
    %v1277 = vld [vmem:[%s6 + $0x30] sm:$0xf]
    %v1278 = vld [vmem:[%s6 + $0x34] sm:$0xf]
    %v1279 = vld [vmem:[%s6 + $0x38] sm:$0xf]
    %v1280 = vld [vmem:[%s6 + $0x3c] sm:$0xf]
    %v1281 = vld [vmem:[%s7] sm:$0x1]
    %v1283 = vlaneseq
    %v1284 = vshrl.u32 %v1283, 7
    %v1285 = vsub.s32 0, %v1284
    %v1286 = vrot.slane %v1281, %v1285
    %v1304 = vunpack.c.l.b16 %v1265
    %v1305 = vunpack.c.l.b16 %v1266
    %v1306 = vunpack.c.l.b16 %v1267
    %v1307 = vunpack.c.l.b16 %v1268
    %v1308 = vunpack.c.l.b16 %v1269
    %v1309 = vunpack.c.l.b16 %v1270
    %v1310 = vunpack.c.l.b16 %v1271
    %v1311 = vunpack.c.l.b16 %v1272
    %v1312 = vunpack.c.l.b16 %v1273
    %v1313 = vunpack.c.l.b16 %v1274
    %v1314 = vunpack.c.l.b16 %v1275
    %v1315 = vunpack.c.l.b16 %v1276
    %v1316 = vunpack.c.l.b16 %v1277
    %v1317 = vunpack.c.l.b16 %v1278
    %v1318 = vunpack.c.l.b16 %v1279
    %v1319 = vunpack.c.l.b16 %v1280
    %v1320 = vpack.c.b16 %v1305, %v1304
    %v1321 = vpack.c.b16 %v1307, %v1306
    %v1322 = vpack.c.b16 %v1309, %v1308
    %v1323 = vpack.c.b16 %v1311, %v1310
    %v1324 = vpack.c.b16 %v1313, %v1312
    %v1325 = vpack.c.b16 %v1315, %v1314
    %v1326 = vpack.c.b16 %v1317, %v1316
    %v1327 = vpack.c.b16 %v1319, %v1318
    %1336 = vmatprep.subr.bf16.mxu0 0
    %1337 = vmatpush1.bf16.msra.mxu0 %v1320
    %1338 = vmatprep.subr.bf16.mxu0 0
    %1339 = vmatpush1.bf16.msra.mxu0 %v1321
    %1340 = vmatprep.subr.bf16.mxu0 0
    %1341 = vmatpush1.bf16.msra.mxu0 %v1322
    %1342 = vmatprep.subr.bf16.mxu0 0
    %1343 = vmatpush1.bf16.msra.mxu0 %v1323
    %1344 = vmatprep.subr.bf16.mxu0 0
    %1345 = vmatpush1.bf16.msra.mxu0 %v1324
    %1346 = vmatprep.subr.bf16.mxu0 0
    %1347 = vmatpush1.bf16.msra.mxu0 %v1325
    %1348 = vmatprep.subr.bf16.mxu0 0
    %1349 = vmatpush1.bf16.msra.mxu0 %v1326
    %1350 = vmatprep.subr.bf16.mxu0 0
    %1351 = vmatpush1.bf16.msra.mxu0 %v1327
    %1352 = vmatprep.subr.bf16.mxu0 0
    %1353 = vmatpush1.bf16.msra.mxu0 0
    %1354 = vmatprep.subr.bf16.mxu0 0
    %1355 = vmatpush1.bf16.msra.mxu0 0
    %1356 = vmatprep.subr.bf16.mxu0 0
    %1357 = vmatpush1.bf16.msra.mxu0 0
    %1358 = vmatprep.subr.bf16.mxu0 0
    %1359 = vmatpush1.bf16.msra.mxu0 0
    %1360 = vmatprep.subr.bf16.mxu0 0
    %1361 = vmatpush1.bf16.msra.mxu0 0
    %1362 = vmatprep.subr.bf16.mxu0 0
    %1363 = vmatpush1.bf16.msra.mxu0 0
    %1364 = vmatprep.subr.bf16.mxu0 0
    %1365 = vmatpush1.bf16.msra.mxu0 0
    %1366 = vmatprep.subr.bf16.mxu0 0
    %1367 = vmatpush1.bf16.msra.mxu0 0
    %1368 = vmatprep.mubr.bf16.mxu0 0
    %1369 = vmatmul.mubr.bf16.gmra.mrb[0].mxu0 %v1264
    %v1370 = vpop.f32.mrb[0].mxu0
    %v1371 = vadd.f32 %v1286, %v1370
    %v1372 = vpop.f32.mrb[0].mxu0
    %v1373 = vpop.f32.mrb[0].mxu0
    %v1374 = vpop.f32.mrb[0].mxu0
    %1375 = vdwg.mxu0
    %vm1376 = vcmask 64512
    %1377 = vst.msk [vmem:[#allocation6] sm:$0xff] %vm1376, %v1371
    %p1378 = scmp.eq.s32.totalorder %s46, 0
    // Predicated region
    $region38: #{gru_rnn_forward.1} parent=1 // pred_check
      %p1379 = pneg %p1378
    $region39: #{gru_rnn_forward.1} parent=1 // pred_check_branch
      %1381 = sbr.rel (%p1379) target = $region41
    $region40: #{gru_rnn_forward.1} parent=1 // pred_region
      %vm1382 = vcmask 57344
      %1383 = vst.msk [vmem:[#allocation6] sm:$0x1] %vm1382, 0.0
    $region41: #{gru_rnn_forward.1} parent=1 // pred_fallthru
      _
    // Predicated region
    $region42: #{gru_rnn_forward.1} parent=1 // pred_check
      _
    $region43: #{gru_rnn_forward.1} parent=1 // pred_check_branch
      %1385 = sbr.rel (0) target = $region45
    $region44: #{gru_rnn_forward.1} parent=1 // pred_region
      %s1387 = ssub.s32 128, 128
      %1388 = vsyncadd [#allocation5], %s1387
      %s1390 = sshll.u32 [#allocation6], 4
      %s1391 = int_to_ptr.vmem [resolvable:$true] %s1390
      %1393 = dma.vmem_to_hbm [thread:$0]  %s1391, 128, %s8, [#allocation5]
    $region45: #{gru_rnn_forward.1} parent=1 // pred_fallthru
      _
    // Predicated region
    $region46: #{gru_rnn_forward.1} parent=1 // pred_check
      _
    $region47: #{gru_rnn_forward.1} parent=1 // pred_check_branch
      %1395 = sbr.rel (0) target = $region49
    $region48: #{gru_rnn_forward.1} parent=1 // pred_region
      %1396 = dma.done [#allocation5], 128
    $region49: #{gru_rnn_forward.1} parent=1 // pred_fallthru
      _
    %1397 = vsyncpa [#allocation4], 1
    %1398 = vsyncpa [#allocation5], 1

</llo_original>
